<compile_context>
chip_gen: v6e
topology: v6e:2x2x1
jax: 0.10.0
libtpu: 0.0.40
codegen_flags: <defaults>
</compile_context>

<pallas_src>
import functools
import math

import jax
import jax.numpy as jnp
from jax import lax
from jax.experimental import pallas as pl
from jax.experimental.pallas import tpu as pltpu


def _mha_kernel(xq_ref, xk_ref, xv_ref, km_ref,
                wq_ref, bq_ref, wk_ref, bk_ref, wv_ref, bv_ref,
                wo_ref, bo_ref, out_ref, *,
                head_count, hidden_dim, forward_masked):
    cd = xq_ref.dtype            # MXU compute dtype (f32 or bf16)

    xq = xq_ref[0]               # (Lq, D)
    xk = xk_ref[0]               # (Lk, D)
    xv = xv_ref[0]               # (Lk, D)

    # Fused projections: all heads at once, K = N = D (single MXU matmul each).
    q = jnp.dot(xq, wq_ref[...], preferred_element_type=jnp.float32) + bq_ref[...]
    k = jnp.dot(xk, wk_ref[...], preferred_element_type=jnp.float32) + bk_ref[...]
    v = jnp.dot(xv, wv_ref[...], preferred_element_type=jnp.float32) + bv_ref[...]

    lq = q.shape[0]
    lk = k.shape[0]

    # Pre-scale queries once (cheaper than scaling every (Lq, Lk) score block).
    q = q * (1.0 / (hidden_dim ** 0.5))

    qc = q.astype(cd)
    kc = k.astype(cd)
    vc = v.astype(cd)

    # Combined boolean mask, built once per batch and shared by every head.
    masked = km_ref[0] > 0.0                 # (1, Lk), broadcasts over queries
    if forward_masked:
        row = lax.broadcasted_iota(jnp.int32, (lq, lk), 0)
        col = lax.broadcasted_iota(jnp.int32, (lq, lk), 1)
        masked = jnp.logical_or(masked, col > row)

    head_outs = []
    for h in range(head_count):
        sl = slice(h * hidden_dim, (h + 1) * hidden_dim)
        qh = qc[:, sl]
        kh = kc[:, sl]
        vh = vc[:, sl]

        # q @ k^T without materializing an explicit transpose of K.
        s = lax.dot_general(qh, kh, (((1,), (1,)), ((), ())),
                            preferred_element_type=jnp.float32)   # (Lq, Lk) f32
        s = jnp.where(masked, -1e30, s)

        # Numerically stable softmax over keys (all f32).
        m = jnp.max(s, axis=-1, keepdims=True)
        e = jnp.exp(s - m)
        p = e * pl.reciprocal(jnp.sum(e, axis=-1, keepdims=True), approx=False)

        head_outs.append(jnp.dot(p.astype(cd), vh,
                                 preferred_element_type=jnp.float32))  # (Lq, hid)

    context = jnp.concatenate(head_outs, axis=-1)                      # (Lq, D) f32

    out = jnp.dot(context.astype(cd), wo_ref[...],
                  preferred_element_type=jnp.float32) + bo_ref[...]
    out_ref[0] = out.astype(out_ref.dtype)


def multi_head_attention_pallas(query, key, value, key_mask, fused, *,
                                head_count, forward_masked):
    """query/key/value: time-major (L, B, D). key_mask: (Lk, B) float (1.0 = masked) or None.

    `fused` is the output of fuse_params(): head-concatenated weights (D, D),
    biases (1, D).  MXU compute dtype is inferred from fused["wq"].dtype.
    """
    lq, b, d = query.shape
    lk = key.shape[0]
    hidden = d // head_count
    cd = fused["wq"].dtype

    # Batch-major for the kernel; the cast to the MXU dtype fuses with the
    # transpose into a single XLA pass (and halves the bytes when cd == bf16).
    xq = jnp.transpose(query, (1, 0, 2)).astype(cd)   # (B, Lq, D)
    xk = jnp.transpose(key, (1, 0, 2)).astype(cd)     # (B, Lk, D)
    xv = jnp.transpose(value, (1, 0, 2)).astype(cd)   # (B, Lk, D)

    if key_mask is None:
        km = jnp.zeros((b, 1, lk), jnp.float32)
    else:
        km = jnp.transpose(key_mask.astype(jnp.float32), (1, 0))[:, None, :]  # (B, 1, Lk)

    kernel = functools.partial(_mha_kernel, head_count=head_count,
                               hidden_dim=hidden, forward_masked=forward_masked)

    const = lambda bi: (0, 0)   # weights/biases: single resident block
    out_bm = pl.pallas_call(
        kernel,
        out_shape=jax.ShapeDtypeStruct((b, lq, d), jnp.float32),
        grid_spec=pltpu.PrefetchScalarGridSpec(
            num_scalar_prefetch=0,
            grid=(b,),
            in_specs=[
                pl.BlockSpec((1, lq, d), lambda bi: (bi, 0, 0)),   # xq
                pl.BlockSpec((1, lk, d), lambda bi: (bi, 0, 0)),   # xk
                pl.BlockSpec((1, lk, d), lambda bi: (bi, 0, 0)),   # xv
                pl.BlockSpec((1, 1, lk), lambda bi: (bi, 0, 0)),   # key mask
                pl.BlockSpec((d, d), const),                       # Wq (fused heads)
                pl.BlockSpec((1, d), const),                       # bq
                pl.BlockSpec((d, d), const),                       # Wk
                pl.BlockSpec((1, d), const),                       # bk
                pl.BlockSpec((d, d), const),                       # Wv
                pl.BlockSpec((1, d), const),                       # bv
                pl.BlockSpec((d, d), const),                       # Wo
                pl.BlockSpec((1, d), const),                       # bo
            ],
            out_specs=pl.BlockSpec((1, lq, d), lambda bi: (bi, 0, 0)),
        ),
        compiler_params=pltpu.CompilerParams(
            dimension_semantics=("parallel",)),
    )(xq, xk, xv, km,
      fused["wq"], fused["bq"], fused["wk"], fused["bk"],
      fused["wv"], fused["bv"], fused["wo"], fused["bo"])

    return jnp.transpose(out_bm, (1, 0, 2))   # back to time-major (Lq, B, D)


def fuse_params(params, head_count, compute_dtype=jnp.float32):
    """Precompute head-concatenated weight slabs once (outside the per-call path).

    nn.Linear stores (out, in); the fused slab W satisfies x @ W == concat_h(x @ W_h.T).
    """
    h, hid, d = params["wq"].shape

    def fuse_w(w):   # (H, hid, D) -> (D, H*hid)
        return jnp.transpose(w, (2, 0, 1)).reshape(d, h * hid).astype(compute_dtype)

    return {
        "wq": fuse_w(params["wq"]),
        "wk": fuse_w(params["wk"]),
        "wv": fuse_w(params["wv"]),
        "bq": params["bq"].reshape(1, h * hid).astype(jnp.float32),
        "bk": params["bk"].reshape(1, h * hid).astype(jnp.float32),
        "bv": params["bv"].reshape(1, h * hid).astype(jnp.float32),
        "wo": params["wo"].T.astype(compute_dtype),        # concat @ Wo.T
        "bo": params["bo"][None, :].astype(jnp.float32),
    }


def multi_head_attention_reference(query, key, value, key_mask, params, *,
                                   head_count, forward_masked):
    """Pure-JAX transcription of the PyTorch forward (time-major)."""
    lq = query.shape[0]
    fm = None
    if forward_masked:
        fm = jnp.triu(jnp.ones((lq, lq), jnp.float32), k=1)[:, None, :] * 1e18
    heads = []
    for h in range(head_count):
        q = query @ params["wq"][h].T + params["bq"][h]
        k = key @ params["wk"][h].T + params["bk"][h]
        v = value @ params["wv"][h].T + params["bv"][h]
        scores = jnp.einsum("imk,jmk->imj", q, k) / (k.shape[2] ** 0.5)
        if key_mask is not None:
            scores = scores - key_mask.astype(jnp.float32).T * 1e18
        if fm is not None:
            scores = scores - fm
        attn = jax.nn.softmax(scores, axis=2)
        heads.append(jnp.einsum("imj,jmk->imk", attn, v))
    concat = jnp.concatenate(heads, axis=2)
    return concat @ params["wo"].T + params["bo"]


def init_params(key, model_dim, head_count):
    hidden = model_dim // head_count
    keys = jax.random.split(key, 8)
    scale = 1.0 / math.sqrt(model_dim)
    return {
        "wq": jax.random.uniform(keys[0], (head_count, hidden, model_dim), jnp.float32, -scale, scale),
        "bq": jax.random.uniform(keys[1], (head_count, hidden), jnp.float32, -scale, scale),
        "wk": jax.random.uniform(keys[2], (head_count, hidden, model_dim), jnp.float32, -scale, scale),
        "bk": jax.random.uniform(keys[3], (head_count, hidden), jnp.float32, -scale, scale),
        "wv": jax.random.uniform(keys[4], (head_count, hidden, model_dim), jnp.float32, -scale, scale),
        "bv": jax.random.uniform(keys[5], (head_count, hidden), jnp.float32, -scale, scale),
        "wo": jax.random.uniform(keys[6], (model_dim, model_dim), jnp.float32, -scale, scale),
        "bo": jax.random.uniform(keys[7], (model_dim,), jnp.float32, -scale, scale),
    }


if __name__ == "__main__":
    MODEL_DIM = 32
    HEAD_COUNT = 4
    SEQ = 16
    BATCH = 2
    FORWARD_MASKED = True   # causal self-attention variant

    root = jax.random.PRNGKey(0)
    k_p, k_q, k_k, k_v = jax.random.split(root, 4)
    params = init_params(k_p, MODEL_DIM, HEAD_COUNT)

    # time-major inputs (L, B, D); self-attention so q/k/v share the sequence length
    query = jax.random.normal(k_q, (SEQ, BATCH, MODEL_DIM), jnp.float32)
    key_in = jax.random.normal(k_k, (SEQ, BATCH, MODEL_DIM), jnp.float32)
    value = jax.random.normal(k_v, (SEQ, BATCH, MODEL_DIM), jnp.float32)

    # key mask (Lk, B): mask out the last 3 key positions of batch 1
    key_mask = jnp.zeros((SEQ, BATCH), jnp.float32).at[-3:, 1].set(1.0)

    ref = multi_head_attention_reference(query, key_in, value, key_mask, params,
                                         head_count=HEAD_COUNT,
                                         forward_masked=FORWARD_MASKED)

    mha = jax.jit(functools.partial(multi_head_attention_pallas,
                                    head_count=HEAD_COUNT,
                                    forward_masked=FORWARD_MASKED))

    # f32 MXU operands: tight match against the PyTorch-equivalent reference.
    fused_f32 = fuse_params(params, HEAD_COUNT, jnp.float32)
    out = jax.block_until_ready(mha(query, key_in, value, key_mask, fused_f32))
    assert out.shape == (SEQ, BATCH, MODEL_DIM)
    assert jnp.allclose(out, ref, rtol=1e-4, atol=1e-4), float(jnp.max(jnp.abs(out - ref)))

    # bf16 MXU operands (v6e/v7x recommendation); softmax/accumulation stay f32.
    fused_bf16 = fuse_params(params, HEAD_COUNT, jnp.bfloat16)
    out_bf16 = jax.block_until_ready(mha(query, key_in, value, key_mask, fused_bf16))
    assert jnp.allclose(out_bf16, ref, rtol=1e-1, atol=1e-1), float(jnp.max(jnp.abs(out_bf16 - ref)))

    print("KERNEL_OK")
</pallas_src>

<mosaic_0001>
module attributes {stable_mosaic.version = 11 : i64} {
  func.func @_mha_kernel(%arg0: i32, %arg1: memref<1x16x32xf32, #tpu.memory_space<vmem>>, %arg2: memref<1x16x32xf32, #tpu.memory_space<vmem>>, %arg3: memref<1x16x32xf32, #tpu.memory_space<vmem>>, %arg4: memref<1x1x16xf32, #tpu.memory_space<vmem>>, %arg5: memref<32x32xf32, #tpu.memory_space<vmem>>, %arg6: memref<1x32xf32, #tpu.memory_space<vmem>>, %arg7: memref<32x32xf32, #tpu.memory_space<vmem>>, %arg8: memref<1x32xf32, #tpu.memory_space<vmem>>, %arg9: memref<32x32xf32, #tpu.memory_space<vmem>>, %arg10: memref<1x32xf32, #tpu.memory_space<vmem>>, %arg11: memref<32x32xf32, #tpu.memory_space<vmem>>, %arg12: memref<1x32xf32, #tpu.memory_space<vmem>>, %arg13: memref<1x16x32xf32, #tpu.memory_space<vmem>>) attributes {dimension_semantics = [#tpu.dimension_semantics<parallel>], iteration_bounds = array<i64: 2>, scalar_prefetch = 0 : i64, scratch_operands = 0 : i64, tpu.core_type = #tpu.core_type<tc>, window_params = [{transform_indices = @transform_0, window_bounds = array<i64: 1, 16, 32>}, {transform_indices = @transform_1, window_bounds = array<i64: 1, 16, 32>}, {transform_indices = @transform_2, window_bounds = array<i64: 1, 16, 32>}, {transform_indices = @transform_3, window_bounds = array<i64: 1, 1, 16>}, {pipeline_mode = #tpu.pipeline_mode<synchronous>, transform_indices = @transform_4, window_bounds = array<i64: 32, 32>}, {pipeline_mode = #tpu.pipeline_mode<synchronous>, transform_indices = @transform_5, window_bounds = array<i64: 1, 32>}, {pipeline_mode = #tpu.pipeline_mode<synchronous>, transform_indices = @transform_6, window_bounds = array<i64: 32, 32>}, {pipeline_mode = #tpu.pipeline_mode<synchronous>, transform_indices = @transform_7, window_bounds = array<i64: 1, 32>}, {pipeline_mode = #tpu.pipeline_mode<synchronous>, transform_indices = @transform_8, window_bounds = array<i64: 32, 32>}, {pipeline_mode = #tpu.pipeline_mode<synchronous>, transform_indices = @transform_9, window_bounds = array<i64: 1, 32>}, {pipeline_mode = #tpu.pipeline_mode<synchronous>, transform_indices = @transform_10, window_bounds = array<i64: 32, 32>}, {pipeline_mode = #tpu.pipeline_mode<synchronous>, transform_indices = @transform_11, window_bounds = array<i64: 1, 32>}, {transform_indices = @transform_12, window_bounds = array<i64: 1, 16, 32>}]} {
    %c0 = arith.constant 0 : index
    %c0_0 = arith.constant 0 : index
    %c0_1 = arith.constant 0 : index
    %0 = vector.load %arg1[%c0, %c0_0, %c0_1] : memref<1x16x32xf32, #tpu.memory_space<vmem>>, vector<1x16x32xf32>
    %1 = vector.shape_cast %0 : vector<1x16x32xf32> to vector<16x32xf32>
    %c0_2 = arith.constant 0 : index
    %c0_3 = arith.constant 0 : index
    %c0_4 = arith.constant 0 : index
    %2 = vector.load %arg2[%c0_2, %c0_3, %c0_4] : memref<1x16x32xf32, #tpu.memory_space<vmem>>, vector<1x16x32xf32>
    %3 = vector.shape_cast %2 : vector<1x16x32xf32> to vector<16x32xf32>
    %c0_5 = arith.constant 0 : index
    %c0_6 = arith.constant 0 : index
    %c0_7 = arith.constant 0 : index
    %4 = vector.load %arg3[%c0_5, %c0_6, %c0_7] : memref<1x16x32xf32, #tpu.memory_space<vmem>>, vector<1x16x32xf32>
    %5 = vector.shape_cast %4 : vector<1x16x32xf32> to vector<16x32xf32>
    %c0_8 = arith.constant 0 : index
    %c0_9 = arith.constant 0 : index
    %6 = vector.load %arg5[%c0_8, %c0_9] : memref<32x32xf32, #tpu.memory_space<vmem>>, vector<32x32xf32>
    %cst = arith.constant dense<0.000000e+00> : vector<16x32xf32>
    %7 = tpu.matmul %1, %6, %cst {dimension_numbers = #tpu.dot_dimension_numbers<[1], [0], [0], [1], [0, 0, 1, 1], [], []>} : vector<16x32xf32>, vector<32x32xf32>, vector<16x32xf32> -> vector<16x32xf32>
    %c0_10 = arith.constant 0 : index
    %c0_11 = arith.constant 0 : index
    %8 = vector.load %arg6[%c0_10, %c0_11] : memref<1x32xf32, #tpu.memory_space<vmem>>, vector<1x32xf32>
    %9 = vector.broadcast %8 : vector<1x32xf32> to vector<16x32xf32>
    %10 = arith.addf %7, %9 : vector<16x32xf32>
    %c0_12 = arith.constant 0 : index
    %c0_13 = arith.constant 0 : index
    %11 = vector.load %arg7[%c0_12, %c0_13] : memref<32x32xf32, #tpu.memory_space<vmem>>, vector<32x32xf32>
    %cst_14 = arith.constant dense<0.000000e+00> : vector<16x32xf32>
    %12 = tpu.matmul %3, %11, %cst_14 {dimension_numbers = #tpu.dot_dimension_numbers<[1], [0], [0], [1], [0, 0, 1, 1], [], []>} : vector<16x32xf32>, vector<32x32xf32>, vector<16x32xf32> -> vector<16x32xf32>
    %c0_15 = arith.constant 0 : index
    %c0_16 = arith.constant 0 : index
    %13 = vector.load %arg8[%c0_15, %c0_16] : memref<1x32xf32, #tpu.memory_space<vmem>>, vector<1x32xf32>
    %14 = vector.broadcast %13 : vector<1x32xf32> to vector<16x32xf32>
    %15 = arith.addf %12, %14 : vector<16x32xf32>
    %c0_17 = arith.constant 0 : index
    %c0_18 = arith.constant 0 : index
    %16 = vector.load %arg9[%c0_17, %c0_18] : memref<32x32xf32, #tpu.memory_space<vmem>>, vector<32x32xf32>
    %cst_19 = arith.constant dense<0.000000e+00> : vector<16x32xf32>
    %17 = tpu.matmul %5, %16, %cst_19 {dimension_numbers = #tpu.dot_dimension_numbers<[1], [0], [0], [1], [0, 0, 1, 1], [], []>} : vector<16x32xf32>, vector<32x32xf32>, vector<16x32xf32> -> vector<16x32xf32>
    %c0_20 = arith.constant 0 : index
    %c0_21 = arith.constant 0 : index
    %18 = vector.load %arg10[%c0_20, %c0_21] : memref<1x32xf32, #tpu.memory_space<vmem>>, vector<1x32xf32>
    %19 = vector.broadcast %18 : vector<1x32xf32> to vector<16x32xf32>
    %20 = arith.addf %17, %19 : vector<16x32xf32>
    %cst_22 = arith.constant 0.353553385 : f32
    %21 = vector.broadcast %cst_22 : f32 to vector<16x32xf32>
    %22 = arith.mulf %10, %21 : vector<16x32xf32>
    %c0_23 = arith.constant 0 : index
    %c0_24 = arith.constant 0 : index
    %c0_25 = arith.constant 0 : index
    %23 = vector.load %arg4[%c0_23, %c0_24, %c0_25] : memref<1x1x16xf32, #tpu.memory_space<vmem>>, vector<1x1x16xf32>
    %24 = vector.shape_cast %23 : vector<1x1x16xf32> to vector<1x16xf32>
    %cst_26 = arith.constant 0.000000e+00 : f32
    %25 = vector.broadcast %cst_26 : f32 to vector<1x16xf32>
    %26 = arith.cmpf ogt, %24, %25 : vector<1x16xf32>
    %27 = tpu.iota {dimensions = array<i32: 0>} : vector<16x16xi32>
    %28 = tpu.iota {dimensions = array<i32: 1>} : vector<16x16xi32>
    %29 = arith.cmpi sgt, %28, %27 : vector<16x16xi32>
    %30 = vector.broadcast %26 : vector<1x16xi1> to vector<16x16xi1>
    %31 = arith.ori %30, %29 : vector<16x16xi1>
    %32 = vector.extract_strided_slice %22 {offsets = [0, 0], sizes = [16, 8], strides = [1, 1]} : vector<16x32xf32> to vector<16x8xf32>
    %33 = vector.extract_strided_slice %15 {offsets = [0, 0], sizes = [16, 8], strides = [1, 1]} : vector<16x32xf32> to vector<16x8xf32>
    %34 = vector.extract_strided_slice %20 {offsets = [0, 0], sizes = [16, 8], strides = [1, 1]} : vector<16x32xf32> to vector<16x8xf32>
    %cst_27 = arith.constant dense<0.000000e+00> : vector<16x16xf32>
    %35 = tpu.matmul %32, %33, %cst_27 {dimension_numbers = #tpu.dot_dimension_numbers<[1], [1], [0], [0], [0, 0, 1, 0], [], []>} : vector<16x8xf32>, vector<16x8xf32>, vector<16x16xf32> -> vector<16x16xf32>
    %cst_28 = arith.constant -1.000000e+30 : f32
    %36 = vector.broadcast %cst_28 : f32 to vector<16x16xf32>
    %37 = arith.select %31, %36, %35 : vector<16x16xi1>, vector<16x16xf32>
    %cst_29 = arith.constant dense<0xFF800000> : vector<16xf32>
    %38 = vector.multi_reduction <maximumf>, %37, %cst_29 [1] : vector<16x16xf32> to vector<16xf32>
    %39 = vector.shape_cast %38 : vector<16xf32> to vector<16x1xf32>
    %40 = vector.broadcast %39 : vector<16x1xf32> to vector<16x16xf32>
    %41 = arith.subf %37, %40 : vector<16x16xf32>
    %42 = math.exp %41 : vector<16x16xf32>
    %cst_30 = arith.constant dense<0.000000e+00> : vector<16xf32>
    %43 = vector.multi_reduction <add>, %42, %cst_30 [1] : vector<16x16xf32> to vector<16xf32>
    %44 = vector.shape_cast %43 : vector<16xf32> to vector<16x1xf32>
    %45 = tpu.reciprocal %44 : vector<16x1xf32> -> vector<16x1xf32>
    %46 = vector.broadcast %45 : vector<16x1xf32> to vector<16x16xf32>
    %47 = arith.mulf %42, %46 : vector<16x16xf32>
    %cst_31 = arith.constant dense<0.000000e+00> : vector<16x8xf32>
    %48 = tpu.matmul %47, %34, %cst_31 {dimension_numbers = #tpu.dot_dimension_numbers<[1], [0], [0], [1], [0, 0, 1, 1], [], []>} : vector<16x16xf32>, vector<16x8xf32>, vector<16x8xf32> -> vector<16x8xf32>
    %49 = vector.extract_strided_slice %22 {offsets = [0, 8], sizes = [16, 8], strides = [1, 1]} : vector<16x32xf32> to vector<16x8xf32>
    %50 = vector.extract_strided_slice %15 {offsets = [0, 8], sizes = [16, 8], strides = [1, 1]} : vector<16x32xf32> to vector<16x8xf32>
    %51 = vector.extract_strided_slice %20 {offsets = [0, 8], sizes = [16, 8], strides = [1, 1]} : vector<16x32xf32> to vector<16x8xf32>
    %cst_32 = arith.constant dense<0.000000e+00> : vector<16x16xf32>
    %52 = tpu.matmul %49, %50, %cst_32 {dimension_numbers = #tpu.dot_dimension_numbers<[1], [1], [0], [0], [0, 0, 1, 0], [], []>} : vector<16x8xf32>, vector<16x8xf32>, vector<16x16xf32> -> vector<16x16xf32>
    %cst_33 = arith.constant -1.000000e+30 : f32
    %53 = vector.broadcast %cst_33 : f32 to vector<16x16xf32>
    %54 = arith.select %31, %53, %52 : vector<16x16xi1>, vector<16x16xf32>
    %cst_34 = arith.constant dense<0xFF800000> : vector<16xf32>
    %55 = vector.multi_reduction <maximumf>, %54, %cst_34 [1] : vector<16x16xf32> to vector<16xf32>
    %56 = vector.shape_cast %55 : vector<16xf32> to vector<16x1xf32>
    %57 = vector.broadcast %56 : vector<16x1xf32> to vector<16x16xf32>
    %58 = arith.subf %54, %57 : vector<16x16xf32>
    %59 = math.exp %58 : vector<16x16xf32>
    %cst_35 = arith.constant dense<0.000000e+00> : vector<16xf32>
    %60 = vector.multi_reduction <add>, %59, %cst_35 [1] : vector<16x16xf32> to vector<16xf32>
    %61 = vector.shape_cast %60 : vector<16xf32> to vector<16x1xf32>
    %62 = tpu.reciprocal %61 : vector<16x1xf32> -> vector<16x1xf32>
    %63 = vector.broadcast %62 : vector<16x1xf32> to vector<16x16xf32>
    %64 = arith.mulf %59, %63 : vector<16x16xf32>
    %cst_36 = arith.constant dense<0.000000e+00> : vector<16x8xf32>
    %65 = tpu.matmul %64, %51, %cst_36 {dimension_numbers = #tpu.dot_dimension_numbers<[1], [0], [0], [1], [0, 0, 1, 1], [], []>} : vector<16x16xf32>, vector<16x8xf32>, vector<16x8xf32> -> vector<16x8xf32>
    %66 = vector.extract_strided_slice %22 {offsets = [0, 16], sizes = [16, 8], strides = [1, 1]} : vector<16x32xf32> to vector<16x8xf32>
    %67 = vector.extract_strided_slice %15 {offsets = [0, 16], sizes = [16, 8], strides = [1, 1]} : vector<16x32xf32> to vector<16x8xf32>
    %68 = vector.extract_strided_slice %20 {offsets = [0, 16], sizes = [16, 8], strides = [1, 1]} : vector<16x32xf32> to vector<16x8xf32>
    %cst_37 = arith.constant dense<0.000000e+00> : vector<16x16xf32>
    %69 = tpu.matmul %66, %67, %cst_37 {dimension_numbers = #tpu.dot_dimension_numbers<[1], [1], [0], [0], [0, 0, 1, 0], [], []>} : vector<16x8xf32>, vector<16x8xf32>, vector<16x16xf32> -> vector<16x16xf32>
    %cst_38 = arith.constant -1.000000e+30 : f32
    %70 = vector.broadcast %cst_38 : f32 to vector<16x16xf32>
    %71 = arith.select %31, %70, %69 : vector<16x16xi1>, vector<16x16xf32>
    %cst_39 = arith.constant dense<0xFF800000> : vector<16xf32>
    %72 = vector.multi_reduction <maximumf>, %71, %cst_39 [1] : vector<16x16xf32> to vector<16xf32>
    %73 = vector.shape_cast %72 : vector<16xf32> to vector<16x1xf32>
    %74 = vector.broadcast %73 : vector<16x1xf32> to vector<16x16xf32>
    %75 = arith.subf %71, %74 : vector<16x16xf32>
    %76 = math.exp %75 : vector<16x16xf32>
    %cst_40 = arith.constant dense<0.000000e+00> : vector<16xf32>
    %77 = vector.multi_reduction <add>, %76, %cst_40 [1] : vector<16x16xf32> to vector<16xf32>
    %78 = vector.shape_cast %77 : vector<16xf32> to vector<16x1xf32>
    %79 = tpu.reciprocal %78 : vector<16x1xf32> -> vector<16x1xf32>
    %80 = vector.broadcast %79 : vector<16x1xf32> to vector<16x16xf32>
    %81 = arith.mulf %76, %80 : vector<16x16xf32>
    %cst_41 = arith.constant dense<0.000000e+00> : vector<16x8xf32>
    %82 = tpu.matmul %81, %68, %cst_41 {dimension_numbers = #tpu.dot_dimension_numbers<[1], [0], [0], [1], [0, 0, 1, 1], [], []>} : vector<16x16xf32>, vector<16x8xf32>, vector<16x8xf32> -> vector<16x8xf32>
    %83 = vector.extract_strided_slice %22 {offsets = [0, 24], sizes = [16, 8], strides = [1, 1]} : vector<16x32xf32> to vector<16x8xf32>
    %84 = vector.extract_strided_slice %15 {offsets = [0, 24], sizes = [16, 8], strides = [1, 1]} : vector<16x32xf32> to vector<16x8xf32>
    %85 = vector.extract_strided_slice %20 {offsets = [0, 24], sizes = [16, 8], strides = [1, 1]} : vector<16x32xf32> to vector<16x8xf32>
    %cst_42 = arith.constant dense<0.000000e+00> : vector<16x16xf32>
    %86 = tpu.matmul %83, %84, %cst_42 {dimension_numbers = #tpu.dot_dimension_numbers<[1], [1], [0], [0], [0, 0, 1, 0], [], []>} : vector<16x8xf32>, vector<16x8xf32>, vector<16x16xf32> -> vector<16x16xf32>
    %cst_43 = arith.constant -1.000000e+30 : f32
    %87 = vector.broadcast %cst_43 : f32 to vector<16x16xf32>
    %88 = arith.select %31, %87, %86 : vector<16x16xi1>, vector<16x16xf32>
    %cst_44 = arith.constant dense<0xFF800000> : vector<16xf32>
    %89 = vector.multi_reduction <maximumf>, %88, %cst_44 [1] : vector<16x16xf32> to vector<16xf32>
    %90 = vector.shape_cast %89 : vector<16xf32> to vector<16x1xf32>
    %91 = vector.broadcast %90 : vector<16x1xf32> to vector<16x16xf32>
    %92 = arith.subf %88, %91 : vector<16x16xf32>
    %93 = math.exp %92 : vector<16x16xf32>
    %cst_45 = arith.constant dense<0.000000e+00> : vector<16xf32>
    %94 = vector.multi_reduction <add>, %93, %cst_45 [1] : vector<16x16xf32> to vector<16xf32>
    %95 = vector.shape_cast %94 : vector<16xf32> to vector<16x1xf32>
    %96 = tpu.reciprocal %95 : vector<16x1xf32> -> vector<16x1xf32>
    %97 = vector.broadcast %96 : vector<16x1xf32> to vector<16x16xf32>
    %98 = arith.mulf %93, %97 : vector<16x16xf32>
    %cst_46 = arith.constant dense<0.000000e+00> : vector<16x8xf32>
    %99 = tpu.matmul %98, %85, %cst_46 {dimension_numbers = #tpu.dot_dimension_numbers<[1], [0], [0], [1], [0, 0, 1, 1], [], []>} : vector<16x16xf32>, vector<16x8xf32>, vector<16x8xf32> -> vector<16x8xf32>
    %100 = tpu.concatenate %48, %65, %82, %99 in 1 : vector<16x8xf32>, vector<16x8xf32>, vector<16x8xf32>, vector<16x8xf32> -> vector<16x32xf32>
    %c0_47 = arith.constant 0 : index
    %c0_48 = arith.constant 0 : index
    %101 = vector.load %arg11[%c0_47, %c0_48] : memref<32x32xf32, #tpu.memory_space<vmem>>, vector<32x32xf32>
    %cst_49 = arith.constant dense<0.000000e+00> : vector<16x32xf32>
    %102 = tpu.matmul %100, %101, %cst_49 {dimension_numbers = #tpu.dot_dimension_numbers<[1], [0], [0], [1], [0, 0, 1, 1], [], []>} : vector<16x32xf32>, vector<32x32xf32>, vector<16x32xf32> -> vector<16x32xf32>
    %c0_50 = arith.constant 0 : index
    %c0_51 = arith.constant 0 : index
    %103 = vector.load %arg12[%c0_50, %c0_51] : memref<1x32xf32, #tpu.memory_space<vmem>>, vector<1x32xf32>
    %104 = vector.broadcast %103 : vector<1x32xf32> to vector<16x32xf32>
    %105 = arith.addf %102, %104 : vector<16x32xf32>
    %c0_52 = arith.constant 0 : index
    %c0_53 = arith.constant 0 : index
    %c0_54 = arith.constant 0 : index
    %106 = vector.load %arg13[%c0_52, %c0_53, %c0_54] : memref<1x16x32xf32, #tpu.memory_space<vmem>>, vector<1x16x32xf32>
    %107 = vector.shape_cast %106 : vector<1x16x32xf32> to vector<16x32xf32>
    %108 = vector.shape_cast %105 : vector<16x32xf32> to vector<1x16x32xf32>
    tpu.vector_store %arg13[%c0_52, %c0_53, %c0_54], %108 {strides = array<i32>} : memref<1x16x32xf32, #tpu.memory_space<vmem>>, vector<1x16x32xf32>,
    return
  }
  func.func @transform_0(%arg0: i32) -> (i32, i32, i32) {
    %c0_i32 = arith.constant 0 : i32
    %c0_i32_0 = arith.constant 0 : i32
    %c0_i32_1 = arith.constant 0 : i32
    return %arg0, %c0_i32, %c0_i32_0 : i32, i32, i32
  }
  func.func @transform_1(%arg0: i32) -> (i32, i32, i32) {
    %c0_i32 = arith.constant 0 : i32
    %c0_i32_0 = arith.constant 0 : i32
    %c0_i32_1 = arith.constant 0 : i32
    return %arg0, %c0_i32, %c0_i32_0 : i32, i32, i32
  }
  func.func @transform_2(%arg0: i32) -> (i32, i32, i32) {
    %c0_i32 = arith.constant 0 : i32
    %c0_i32_0 = arith.constant 0 : i32
    %c0_i32_1 = arith.constant 0 : i32
    return %arg0, %c0_i32, %c0_i32_0 : i32, i32, i32
  }
  func.func @transform_3(%arg0: i32) -> (i32, i32, i32) {
    %c0_i32 = arith.constant 0 : i32
    %c0_i32_0 = arith.constant 0 : i32
    %c0_i32_1 = arith.constant 0 : i32
    return %arg0, %c0_i32, %c0_i32_0 : i32, i32, i32
  }
  func.func @transform_4(%arg0: i32) -> (i32, i32) {
    %c0_i32 = arith.constant 0 : i32
    %c0_i32_0 = arith.constant 0 : i32
    %c0_i32_1 = arith.constant 0 : i32
    return %c0_i32, %c0_i32_0 : i32, i32
  }
  func.func @transform_5(%arg0: i32) -> (i32, i32) {
    %c0_i32 = arith.constant 0 : i32
    %c0_i32_0 = arith.constant 0 : i32
    %c0_i32_1 = arith.constant 0 : i32
    return %c0_i32, %c0_i32_0 : i32, i32
  }
  func.func @transform_6(%arg0: i32) -> (i32, i32) {
    %c0_i32 = arith.constant 0 : i32
    %c0_i32_0 = arith.constant 0 : i32
    %c0_i32_1 = arith.constant 0 : i32
    return %c0_i32, %c0_i32_0 : i32, i32
  }
  func.func @transform_7(%arg0: i32) -> (i32, i32) {
    %c0_i32 = arith.constant 0 : i32
    %c0_i32_0 = arith.constant 0 : i32
    %c0_i32_1 = arith.constant 0 : i32
    return %c0_i32, %c0_i32_0 : i32, i32
  }
  func.func @transform_8(%arg0: i32) -> (i32, i32) {
    %c0_i32 = arith.constant 0 : i32
    %c0_i32_0 = arith.constant 0 : i32
    %c0_i32_1 = arith.constant 0 : i32
    return %c0_i32, %c0_i32_0 : i32, i32
  }
  func.func @transform_9(%arg0: i32) -> (i32, i32) {
    %c0_i32 = arith.constant 0 : i32
    %c0_i32_0 = arith.constant 0 : i32
    %c0_i32_1 = arith.constant 0 : i32
    return %c0_i32, %c0_i32_0 : i32, i32
  }
  func.func @transform_10(%arg0: i32) -> (i32, i32) {
    %c0_i32 = arith.constant 0 : i32
    %c0_i32_0 = arith.constant 0 : i32
    %c0_i32_1 = arith.constant 0 : i32
    return %c0_i32, %c0_i32_0 : i32, i32
  }
  func.func @transform_11(%arg0: i32) -> (i32, i32) {
    %c0_i32 = arith.constant 0 : i32
    %c0_i32_0 = arith.constant 0 : i32
    %c0_i32_1 = arith.constant 0 : i32
    return %c0_i32, %c0_i32_0 : i32, i32
  }
  func.func @transform_12(%arg0: i32) -> (i32, i32, i32) {
    %c0_i32 = arith.constant 0 : i32
    %c0_i32_0 = arith.constant 0 : i32
    %c0_i32_1 = arith.constant 0 : i32
    return %arg0, %c0_i32, %c0_i32_0 : i32, i32, i32
  }
}

</mosaic_0001>

<llo_original>
// kernel: multi_head_attention_pallas.1
$region0: #{multi_head_attention_pallas.1}
  #allocation0 [shape = 'u32[]', space=smem, size = 0x4, offset = 0x4, fixed_abs, tag = 'smem constant byte address 0x4 - core index']
  #allocation1 [shape = 'u32[144,128]{1,0:T(1,128)}', space=vmem, size = 0x12000, scoped, tag = 'internal scratch']
  %s0 = inlined_call_operand.vmem [shape: f32[2,16,32], index: 0, kind: input, shape index: {}]
  %s1 = inlined_call_operand.vmem [shape: f32[2,16,32], index: 1, kind: input, shape index: {}]
  %s2 = inlined_call_operand.vmem [shape: f32[2,16,32], index: 2, kind: input, shape index: {}]
  %s3 = inlined_call_operand.vmem [shape: f32[2,1,16], index: 3, kind: input, shape index: {}]
  %s4 = inlined_call_operand.vmem [shape: f32[32,32], index: 4, kind: input, shape index: {}]
  %s5 = inlined_call_operand.vmem [shape: f32[1,32], index: 5, kind: input, shape index: {}]
  %s6 = inlined_call_operand.vmem [shape: f32[32,32], index: 6, kind: input, shape index: {}]
  %s7 = inlined_call_operand.vmem [shape: f32[1,32], index: 7, kind: input, shape index: {}]
  %s8 = inlined_call_operand.vmem [shape: f32[32,32], index: 8, kind: input, shape index: {}]
  %s9 = inlined_call_operand.vmem [shape: f32[1,32], index: 9, kind: input, shape index: {}]
  %s10 = inlined_call_operand.vmem [shape: f32[32,32], index: 10, kind: input, shape index: {}]
  %s11 = inlined_call_operand.vmem [shape: f32[1,32], index: 11, kind: input, shape index: {}]
  %s12 = inlined_call_operand.vmem [shape: f32[2,16,32], index: 12, kind: output, shape index: {}]
  %s13 = sld [smem:[#allocation0]]
  $region81: #{multi_head_attention_pallas.1} parent=0
    _
  %s15 = ssub.s32 1, %s13
  %s16 = scalar_select 0, %s15, %s13
  loop: start=0, step=1, limit=4
  $region2: #{multi_head_attention_pallas.1} parent=0 // loop_pre_header
    _
  $region3: #{multi_head_attention_pallas.1} parent=0 // loop_header
    %s18 = sphi 0, %s22
    %p19 = scmp.ge.s32.totalorder %s18, 4
    %s28 = sphi 0, %s30
    %s31 = sphi 0, %s28
    %s32 = sphi 0, %s31
    %s48 = sphi 0, %s32
    %s54 = sphi 0, %s56
    %s57 = sphi 0, %s54
    %s58 = sphi 0, %s57
    %s74 = sphi 0, %s58
    %s80 = sphi 0, %s82
    %s83 = sphi 0, %s80
    %s84 = sphi 0, %s83
    %s100 = sphi 0, %s84
    %s106 = sphi 0, %s108
    %s109 = sphi 0, %s106
    %s110 = sphi 0, %s109
    %s126 = sphi 0, %s110
    %s130 = sphi 0, %s130
    %s132 = sphi 0, %s130
    %s133 = sphi 0, %s132
    %s147 = sphi 0, %s133
    %s151 = sphi 0, %s151
    %s153 = sphi 0, %s151
    %s154 = sphi 0, %s153
    %s168 = sphi 0, %s154
    %s172 = sphi 0, %s172
    %s174 = sphi 0, %s172
    %s175 = sphi 0, %s174
    %s189 = sphi 0, %s175
    %s193 = sphi 0, %s193
    %s195 = sphi 0, %s193
    %s196 = sphi 0, %s195
    %s210 = sphi 0, %s196
    %s214 = sphi 0, %s214
    %s216 = sphi 0, %s214
    %s217 = sphi 0, %s216
    %s231 = sphi 0, %s217
    %s235 = sphi 0, %s235
    %s237 = sphi 0, %s235
    %s238 = sphi 0, %s237
    %s252 = sphi 0, %s238
    %s256 = sphi 0, %s256
    %s258 = sphi 0, %s256
    %s259 = sphi 0, %s258
    %s273 = sphi 0, %s259
    %s277 = sphi 0, %s277
    %s279 = sphi 0, %s277
    %s280 = sphi 0, %s279
    %s294 = sphi 0, %s280
    %s300 = sphi 0, %s302
    %s303 = sphi 0, %s300
    %s304 = sphi 0, %s303
    %s320 = sphi 0, %s304
  $region4: #{multi_head_attention_pallas.1} parent=0 // loop_header_branch
    %21 = sbr.rel (%p19) target = $region8
  $region5: #{multi_head_attention_pallas.1} parent=0 // loop_body
    %s23 = ssub.s32 %s18, 1
    %s24 = ssub.s32 %s18, 2
    %s25 = sadd.s32 %s18, 1
    %s26 = ssub.s32 %s18, %s25
    %p27 = scmp.eq.s32.totalorder %s26, 0
    %s29 = sadd.s32 %s28, 1
    %s30 = scalar_select %p27, %s28, %s29
    %p33 = pneg %p27
    %p34 = scmp.eq.s32.totalorder %s18, 1
    %p35 = por %p33, %p34
    %p36 = scmp.ne.s32.totalorder %s28, %s31
    %p37 = scmp.eq.s32.totalorder %s18, 0
    %p38 = por %p36, %p37
    %p39 = scmp.ne.s32.totalorder %s28, %s31
    %p40 = scmp.eq.s32.totalorder %s23, 1
    %p41 = por %p39, %p40
    %p42 = scmp.ne.s32.totalorder %s31, %s32
    %p43 = scmp.eq.s32.totalorder %s23, 0
    %p44 = por %p42, %p43
    %p45 = scmp.ne.s32.totalorder %s31, %s32
    %p46 = scmp.eq.s32.totalorder %s24, 1
    %p47 = por %p45, %p46
    %p49 = scmp.ne.s32.totalorder %s32, %s48
    %p50 = scmp.eq.s32.totalorder %s24, 0
    %p51 = por %p49, %p50
    %s52 = ssub.s32 %s18, %s25
    %p53 = scmp.eq.s32.totalorder %s52, 0
    %s55 = sadd.s32 %s54, 1
    %s56 = scalar_select %p53, %s54, %s55
    %p59 = pneg %p53
    %p60 = scmp.eq.s32.totalorder %s18, 1
    %p61 = por %p59, %p60
    %p62 = scmp.ne.s32.totalorder %s54, %s57
    %p63 = scmp.eq.s32.totalorder %s18, 0
    %p64 = por %p62, %p63
    %p65 = scmp.ne.s32.totalorder %s54, %s57
    %p66 = scmp.eq.s32.totalorder %s23, 1
    %p67 = por %p65, %p66
    %p68 = scmp.ne.s32.totalorder %s57, %s58
    %p69 = scmp.eq.s32.totalorder %s23, 0
    %p70 = por %p68, %p69
    %p71 = scmp.ne.s32.totalorder %s57, %s58
    %p72 = scmp.eq.s32.totalorder %s24, 1
    %p73 = por %p71, %p72
    %p75 = scmp.ne.s32.totalorder %s58, %s74
    %p76 = scmp.eq.s32.totalorder %s24, 0
    %p77 = por %p75, %p76
    %s78 = ssub.s32 %s18, %s25
    %p79 = scmp.eq.s32.totalorder %s78, 0
    %s81 = sadd.s32 %s80, 1
    %s82 = scalar_select %p79, %s80, %s81
    %p85 = pneg %p79
    %p86 = scmp.eq.s32.totalorder %s18, 1
    %p87 = por %p85, %p86
    %p88 = scmp.ne.s32.totalorder %s80, %s83
    %p89 = scmp.eq.s32.totalorder %s18, 0
    %p90 = por %p88, %p89
    %p91 = scmp.ne.s32.totalorder %s80, %s83
    %p92 = scmp.eq.s32.totalorder %s23, 1
    %p93 = por %p91, %p92
    %p94 = scmp.ne.s32.totalorder %s83, %s84
    %p95 = scmp.eq.s32.totalorder %s23, 0
    %p96 = por %p94, %p95
    %p97 = scmp.ne.s32.totalorder %s83, %s84
    %p98 = scmp.eq.s32.totalorder %s24, 1
    %p99 = por %p97, %p98
    %p101 = scmp.ne.s32.totalorder %s84, %s100
    %p102 = scmp.eq.s32.totalorder %s24, 0
    %p103 = por %p101, %p102
    %s104 = ssub.s32 %s18, %s25
    %p105 = scmp.eq.s32.totalorder %s104, 0
    %s107 = sadd.s32 %s106, 1
    %s108 = scalar_select %p105, %s106, %s107
    %p111 = pneg %p105
    %p112 = scmp.eq.s32.totalorder %s18, 1
    %p113 = por %p111, %p112
    %p114 = scmp.ne.s32.totalorder %s106, %s109
    %p115 = scmp.eq.s32.totalorder %s18, 0
    %p116 = por %p114, %p115
    %p117 = scmp.ne.s32.totalorder %s106, %s109
    %p118 = scmp.eq.s32.totalorder %s23, 1
    %p119 = por %p117, %p118
    %p120 = scmp.ne.s32.totalorder %s109, %s110
    %p121 = scmp.eq.s32.totalorder %s23, 0
    %p122 = por %p120, %p121
    %p123 = scmp.ne.s32.totalorder %s109, %s110
    %p124 = scmp.eq.s32.totalorder %s24, 1
    %p125 = por %p123, %p124
    %p127 = scmp.ne.s32.totalorder %s110, %s126
    %p128 = scmp.eq.s32.totalorder %s24, 0
    %p129 = por %p127, %p128
    %s131 = sadd.s32 %s130, 1
    %p134 = scmp.eq.s32.totalorder %s18, 1
    %p135 = scmp.ne.s32.totalorder %s130, %s132
    %p136 = scmp.eq.s32.totalorder %s18, 0
    %p137 = por %p135, %p136
    %p138 = scmp.ne.s32.totalorder %s130, %s132
    %p139 = scmp.eq.s32.totalorder %s23, 1
    %p140 = por %p138, %p139
    %p141 = scmp.ne.s32.totalorder %s132, %s133
    %p142 = scmp.eq.s32.totalorder %s23, 0
    %p143 = por %p141, %p142
    %p144 = scmp.ne.s32.totalorder %s132, %s133
    %p145 = scmp.eq.s32.totalorder %s24, 1
    %p146 = por %p144, %p145
    %p148 = scmp.ne.s32.totalorder %s133, %s147
    %p149 = scmp.eq.s32.totalorder %s24, 0
    %p150 = por %p148, %p149
    %s152 = sadd.s32 %s151, 1
    %p155 = scmp.eq.s32.totalorder %s18, 1
    %p156 = scmp.ne.s32.totalorder %s151, %s153
    %p157 = scmp.eq.s32.totalorder %s18, 0
    %p158 = por %p156, %p157
    %p159 = scmp.ne.s32.totalorder %s151, %s153
    %p160 = scmp.eq.s32.totalorder %s23, 1
    %p161 = por %p159, %p160
    %p162 = scmp.ne.s32.totalorder %s153, %s154
    %p163 = scmp.eq.s32.totalorder %s23, 0
    %p164 = por %p162, %p163
    %p165 = scmp.ne.s32.totalorder %s153, %s154
    %p166 = scmp.eq.s32.totalorder %s24, 1
    %p167 = por %p165, %p166
    %p169 = scmp.ne.s32.totalorder %s154, %s168
    %p170 = scmp.eq.s32.totalorder %s24, 0
    %p171 = por %p169, %p170
    %s173 = sadd.s32 %s172, 1
    %p176 = scmp.eq.s32.totalorder %s18, 1
    %p177 = scmp.ne.s32.totalorder %s172, %s174
    %p178 = scmp.eq.s32.totalorder %s18, 0
    %p179 = por %p177, %p178
    %p180 = scmp.ne.s32.totalorder %s172, %s174
    %p181 = scmp.eq.s32.totalorder %s23, 1
    %p182 = por %p180, %p181
    %p183 = scmp.ne.s32.totalorder %s174, %s175
    %p184 = scmp.eq.s32.totalorder %s23, 0
    %p185 = por %p183, %p184
    %p186 = scmp.ne.s32.totalorder %s174, %s175
    %p187 = scmp.eq.s32.totalorder %s24, 1
    %p188 = por %p186, %p187
    %p190 = scmp.ne.s32.totalorder %s175, %s189
    %p191 = scmp.eq.s32.totalorder %s24, 0
    %p192 = por %p190, %p191
    %s194 = sadd.s32 %s193, 1
    %p197 = scmp.eq.s32.totalorder %s18, 1
    %p198 = scmp.ne.s32.totalorder %s193, %s195
    %p199 = scmp.eq.s32.totalorder %s18, 0
    %p200 = por %p198, %p199
    %p201 = scmp.ne.s32.totalorder %s193, %s195
    %p202 = scmp.eq.s32.totalorder %s23, 1
    %p203 = por %p201, %p202
    %p204 = scmp.ne.s32.totalorder %s195, %s196
    %p205 = scmp.eq.s32.totalorder %s23, 0
    %p206 = por %p204, %p205
    %p207 = scmp.ne.s32.totalorder %s195, %s196
    %p208 = scmp.eq.s32.totalorder %s24, 1
    %p209 = por %p207, %p208
    %p211 = scmp.ne.s32.totalorder %s196, %s210
    %p212 = scmp.eq.s32.totalorder %s24, 0
    %p213 = por %p211, %p212
    %s215 = sadd.s32 %s214, 1
    %p218 = scmp.eq.s32.totalorder %s18, 1
    %p219 = scmp.ne.s32.totalorder %s214, %s216
    %p220 = scmp.eq.s32.totalorder %s18, 0
    %p221 = por %p219, %p220
    %p222 = scmp.ne.s32.totalorder %s214, %s216
    %p223 = scmp.eq.s32.totalorder %s23, 1
    %p224 = por %p222, %p223
    %p225 = scmp.ne.s32.totalorder %s216, %s217
    %p226 = scmp.eq.s32.totalorder %s23, 0
    %p227 = por %p225, %p226
    %p228 = scmp.ne.s32.totalorder %s216, %s217
    %p229 = scmp.eq.s32.totalorder %s24, 1
    %p230 = por %p228, %p229
    %p232 = scmp.ne.s32.totalorder %s217, %s231
    %p233 = scmp.eq.s32.totalorder %s24, 0
    %p234 = por %p232, %p233
    %s236 = sadd.s32 %s235, 1
    %p239 = scmp.eq.s32.totalorder %s18, 1
    %p240 = scmp.ne.s32.totalorder %s235, %s237
    %p241 = scmp.eq.s32.totalorder %s18, 0
    %p242 = por %p240, %p241
    %p243 = scmp.ne.s32.totalorder %s235, %s237
    %p244 = scmp.eq.s32.totalorder %s23, 1
    %p245 = por %p243, %p244
    %p246 = scmp.ne.s32.totalorder %s237, %s238
    %p247 = scmp.eq.s32.totalorder %s23, 0
    %p248 = por %p246, %p247
    %p249 = scmp.ne.s32.totalorder %s237, %s238
    %p250 = scmp.eq.s32.totalorder %s24, 1
    %p251 = por %p249, %p250
    %p253 = scmp.ne.s32.totalorder %s238, %s252
    %p254 = scmp.eq.s32.totalorder %s24, 0
    %p255 = por %p253, %p254
    %s257 = sadd.s32 %s256, 1
    %p260 = scmp.eq.s32.totalorder %s18, 1
    %p261 = scmp.ne.s32.totalorder %s256, %s258
    %p262 = scmp.eq.s32.totalorder %s18, 0
    %p263 = por %p261, %p262
    %p264 = scmp.ne.s32.totalorder %s256, %s258
    %p265 = scmp.eq.s32.totalorder %s23, 1
    %p266 = por %p264, %p265
    %p267 = scmp.ne.s32.totalorder %s258, %s259
    %p268 = scmp.eq.s32.totalorder %s23, 0
    %p269 = por %p267, %p268
    %p270 = scmp.ne.s32.totalorder %s258, %s259
    %p271 = scmp.eq.s32.totalorder %s24, 1
    %p272 = por %p270, %p271
    %p274 = scmp.ne.s32.totalorder %s259, %s273
    %p275 = scmp.eq.s32.totalorder %s24, 0
    %p276 = por %p274, %p275
    %s278 = sadd.s32 %s277, 1
    %p281 = scmp.eq.s32.totalorder %s18, 1
    %p282 = scmp.ne.s32.totalorder %s277, %s279
    %p283 = scmp.eq.s32.totalorder %s18, 0
    %p284 = por %p282, %p283
    %p285 = scmp.ne.s32.totalorder %s277, %s279
    %p286 = scmp.eq.s32.totalorder %s23, 1
    %p287 = por %p285, %p286
    %p288 = scmp.ne.s32.totalorder %s279, %s280
    %p289 = scmp.eq.s32.totalorder %s23, 0
    %p290 = por %p288, %p289
    %p291 = scmp.ne.s32.totalorder %s279, %s280
    %p292 = scmp.eq.s32.totalorder %s24, 1
    %p293 = por %p291, %p292
    %p295 = scmp.ne.s32.totalorder %s280, %s294
    %p296 = scmp.eq.s32.totalorder %s24, 0
    %p297 = por %p295, %p296
    %s298 = ssub.s32 %s18, %s25
    %p299 = scmp.eq.s32.totalorder %s298, 0
    %s301 = sadd.s32 %s300, 1
    %s302 = scalar_select %p299, %s300, %s301
    %p305 = pneg %p299
    %p306 = scmp.eq.s32.totalorder %s18, 1
    %p307 = por %p305, %p306
    %p308 = scmp.ne.s32.totalorder %s300, %s303
    %p309 = scmp.eq.s32.totalorder %s18, 0
    %p310 = por %p308, %p309
    %p311 = scmp.ne.s32.totalorder %s300, %s303
    %p312 = scmp.eq.s32.totalorder %s23, 1
    %p313 = por %p311, %p312
    %p314 = scmp.ne.s32.totalorder %s303, %s304
    %p315 = scmp.eq.s32.totalorder %s23, 0
    %p316 = por %p314, %p315
    %p317 = scmp.ne.s32.totalorder %s303, %s304
    %p318 = scmp.eq.s32.totalorder %s24, 1
    %p319 = por %p317, %p318
    %p321 = scmp.ne.s32.totalorder %s304, %s320
    %p322 = scmp.eq.s32.totalorder %s24, 0
    %p323 = por %p321, %p322
    %p324 = scmp.le.s32.totalorder 1, %s18
    %p325 = scmp.lt.s32.totalorder %s18, 3
    %p326 = pnand %p324, %p325
    %p327 = pneg %p326
    // Predicated region
    $region9: #{multi_head_attention_pallas.1} parent=5 // pred_check
      _
    $region10: #{multi_head_attention_pallas.1} parent=5 // pred_check_branch
      %329 = sbr.rel (%p326) target = $region12
    $region11: #{multi_head_attention_pallas.1} parent=5 // pred_region
      %s330 = ssub.s32 %s18, 1
      // Predicated region
      $region13: #{multi_head_attention_pallas.1} parent=11 // pred_check
        %p331 = pneg %p143
      $region14: #{multi_head_attention_pallas.1} parent=11 // pred_check_branch
        %333 = sbr.rel (%p331) target = $region16
      $region15: #{multi_head_attention_pallas.1} parent=11 // pred_region
        _
      $region16: #{multi_head_attention_pallas.1} parent=11 // pred_fallthru
        _
      // Predicated region
      $region17: #{multi_head_attention_pallas.1} parent=11 // pred_check
        %p334 = pneg %p164
      $region18: #{multi_head_attention_pallas.1} parent=11 // pred_check_branch
        %336 = sbr.rel (%p334) target = $region20
      $region19: #{multi_head_attention_pallas.1} parent=11 // pred_region
        _
      $region20: #{multi_head_attention_pallas.1} parent=11 // pred_fallthru
        _
      // Predicated region
      $region21: #{multi_head_attention_pallas.1} parent=11 // pred_check
        %p337 = pneg %p185
      $region22: #{multi_head_attention_pallas.1} parent=11 // pred_check_branch
        %339 = sbr.rel (%p337) target = $region24
      $region23: #{multi_head_attention_pallas.1} parent=11 // pred_region
        _
      $region24: #{multi_head_attention_pallas.1} parent=11 // pred_fallthru
        _
      // Predicated region
      $region25: #{multi_head_attention_pallas.1} parent=11 // pred_check
        %p340 = pneg %p206
      $region26: #{multi_head_attention_pallas.1} parent=11 // pred_check_branch
        %342 = sbr.rel (%p340) target = $region28
      $region27: #{multi_head_attention_pallas.1} parent=11 // pred_region
        _
      $region28: #{multi_head_attention_pallas.1} parent=11 // pred_fallthru
        _
      // Predicated region
      $region29: #{multi_head_attention_pallas.1} parent=11 // pred_check
        %p343 = pneg %p227
      $region30: #{multi_head_attention_pallas.1} parent=11 // pred_check_branch
        %345 = sbr.rel (%p343) target = $region32
      $region31: #{multi_head_attention_pallas.1} parent=11 // pred_region
        _
      $region32: #{multi_head_attention_pallas.1} parent=11 // pred_fallthru
        _
      // Predicated region
      $region33: #{multi_head_attention_pallas.1} parent=11 // pred_check
        %p346 = pneg %p248
      $region34: #{multi_head_attention_pallas.1} parent=11 // pred_check_branch
        %348 = sbr.rel (%p346) target = $region36
      $region35: #{multi_head_attention_pallas.1} parent=11 // pred_region
        _
      $region36: #{multi_head_attention_pallas.1} parent=11 // pred_fallthru
        _
      // Predicated region
      $region37: #{multi_head_attention_pallas.1} parent=11 // pred_check
        %p349 = pneg %p269
      $region38: #{multi_head_attention_pallas.1} parent=11 // pred_check_branch
        %351 = sbr.rel (%p349) target = $region40
      $region39: #{multi_head_attention_pallas.1} parent=11 // pred_region
        _
      $region40: #{multi_head_attention_pallas.1} parent=11 // pred_fallthru
        _
      // Predicated region
      $region41: #{multi_head_attention_pallas.1} parent=11 // pred_check
        %p352 = pneg %p290
      $region42: #{multi_head_attention_pallas.1} parent=11 // pred_check_branch
        %354 = sbr.rel (%p352) target = $region44
      $region43: #{multi_head_attention_pallas.1} parent=11 // pred_region
        _
      $region44: #{multi_head_attention_pallas.1} parent=11 // pred_fallthru
        _
    $region12: #{multi_head_attention_pallas.1} parent=5 // pred_fallthru
      _
    %p355 = scmp.lt.s32.totalorder %s18, 2
    // Predicated region
    $region45: #{multi_head_attention_pallas.1} parent=5 // pred_check
      %p356 = pneg %p355
    $region46: #{multi_head_attention_pallas.1} parent=5 // pred_check_branch
      %358 = sbr.rel (%p356) target = $region48
    $region47: #{multi_head_attention_pallas.1} parent=5 // pred_region
      // Predicated region
      $region49: #{multi_head_attention_pallas.1} parent=47 // pred_check
        %p359 = pneg %p38
      $region50: #{multi_head_attention_pallas.1} parent=47 // pred_check_branch
        %361 = sbr.rel (%p359) target = $region52
      $region51: #{multi_head_attention_pallas.1} parent=47 // pred_region
        %p362 = scmp.lt.s32.totalorder %s18, 1
        %s363 = scalar_select %p362, %s18, 1
        %s364 = smul.addr %s363, 2
        %s365 = smul.addr %s364, 8
        %s366 = scalar_lea.vmem %s0, %s365
      $region52: #{multi_head_attention_pallas.1} parent=47 // pred_fallthru
        _
      // Predicated region
      $region53: #{multi_head_attention_pallas.1} parent=47 // pred_check
        %p367 = pneg %p64
      $region54: #{multi_head_attention_pallas.1} parent=47 // pred_check_branch
        %369 = sbr.rel (%p367) target = $region56
      $region55: #{multi_head_attention_pallas.1} parent=47 // pred_region
        %p370 = scmp.lt.s32.totalorder %s18, 1
        %s371 = scalar_select %p370, %s18, 1
        %s372 = smul.addr %s371, 2
        %s373 = smul.addr %s372, 8
        %s374 = scalar_lea.vmem %s1, %s373
      $region56: #{multi_head_attention_pallas.1} parent=47 // pred_fallthru
        _
      // Predicated region
      $region57: #{multi_head_attention_pallas.1} parent=47 // pred_check
        %p375 = pneg %p90
      $region58: #{multi_head_attention_pallas.1} parent=47 // pred_check_branch
        %377 = sbr.rel (%p375) target = $region60
      $region59: #{multi_head_attention_pallas.1} parent=47 // pred_region
        %p378 = scmp.lt.s32.totalorder %s18, 1
        %s379 = scalar_select %p378, %s18, 1
        %s380 = smul.addr %s379, 2
        %s381 = smul.addr %s380, 8
        %s382 = scalar_lea.vmem %s2, %s381
      $region60: #{multi_head_attention_pallas.1} parent=47 // pred_fallthru
        _
      // Predicated region
      $region61: #{multi_head_attention_pallas.1} parent=47 // pred_check
        %p383 = pneg %p116
      $region62: #{multi_head_attention_pallas.1} parent=47 // pred_check_branch
        %385 = sbr.rel (%p383) target = $region64
      $region63: #{multi_head_attention_pallas.1} parent=47 // pred_region
        %p386 = scmp.lt.s32.totalorder %s18, 1
        %s387 = scalar_select %p386, %s18, 1
        %s388 = scalar_lea.vmem %s3, %s387
      $region64: #{multi_head_attention_pallas.1} parent=47 // pred_fallthru
        _
    $region48: #{multi_head_attention_pallas.1} parent=5 // pred_fallthru
      _
    %p389 = scmp.le.s32.totalorder 1, %s18
    %p390 = scmp.lt.s32.totalorder %s18, 3
    %p391 = pnand %p389, %p390
    %p392 = pneg %p391
    // Predicated region
    $region65: #{multi_head_attention_pallas.1} parent=5 // pred_check
      _
    $region66: #{multi_head_attention_pallas.1} parent=5 // pred_check_branch
      %394 = sbr.rel (%p391) target = $region68
    $region67: #{multi_head_attention_pallas.1} parent=5 // pred_region
      %s395 = ssub.s32 %s18, 1
      %p396 = scmp.lt.s32.totalorder %s23, 1
      %s397 = scalar_select %p396, %s23, 1
      %s398 = smul.addr %s397, 2
      %s399 = smul.addr %s398, 8
      %s400 = scalar_lea.vmem %s0, %s399
      %p401 = pneg %p44
      %p402 = pneg %p41
      %p403 = scmp.lt.s32.totalorder %s23, 1
      %s404 = scalar_select %p403, %s23, 1
      %s405 = smul.addr %s404, 2
      %s406 = smul.addr %s405, 8
      %s407 = scalar_lea.vmem %s1, %s406
      %p408 = pneg %p70
      %p409 = pneg %p67
      %p410 = scmp.lt.s32.totalorder %s23, 1
      %s411 = scalar_select %p410, %s23, 1
      %s412 = smul.addr %s411, 2
      %s413 = smul.addr %s412, 8
      %s414 = scalar_lea.vmem %s2, %s413
      %p415 = pneg %p96
      %p416 = pneg %p93
      %p417 = scmp.lt.s32.totalorder %s23, 1
      %s418 = scalar_select %p417, %s23, 1
      %s419 = scalar_lea.vmem %s3, %s418
      %p420 = pneg %p122
      %p421 = pneg %p119
      %p422 = pneg %p143
      %p423 = pneg %p140
      %p424 = pneg %p164
      %p425 = pneg %p161
      %p426 = pneg %p185
      %p427 = pneg %p182
      %p428 = pneg %p206
      %p429 = pneg %p203
      %p430 = pneg %p227
      %p431 = pneg %p224
      %p432 = pneg %p248
      %p433 = pneg %p245
      %p434 = pneg %p269
      %p435 = pneg %p266
      %p436 = pneg %p290
      %p437 = pneg %p287
      %p438 = pneg %p316
      %p439 = pneg %p313
      %p440 = scmp.lt.s32.totalorder %s23, 1
      %s441 = scalar_select %p440, %s23, 1
      %s442 = smul.addr %s441, 2
      %s443 = smul.addr %s442, 8
      %s444 = scalar_lea.vmem %s12, %s443
      %p445 = scmp.lt.s32.totalorder %s23, 1
      %s446 = scalar_select %p445, %s23, 1
      %s447 = smul.addr %s446, 2
      %s448 = smul.addr %s447, 8
      %s449 = scalar_lea.vmem %s0, %s448
      %p450 = scmp.lt.s32.totalorder %s23, 1
      %s451 = scalar_select %p450, %s23, 1
      %s452 = smul.addr %s451, 2
      %s453 = smul.addr %s452, 8
      %s454 = scalar_lea.vmem %s1, %s453
      %p455 = scmp.lt.s32.totalorder %s23, 1
      %s456 = scalar_select %p455, %s23, 1
      %s457 = smul.addr %s456, 2
      %s458 = smul.addr %s457, 8
      %s459 = scalar_lea.vmem %s2, %s458
      %p460 = scmp.lt.s32.totalorder %s23, 1
      %s461 = scalar_select %p460, %s23, 1
      %s462 = scalar_lea.vmem %s3, %s461
      %p463 = scmp.lt.s32.totalorder %s23, 1
      %s464 = scalar_select %p463, %s23, 1
      %s465 = smul.addr %s464, 2
      %s466 = smul.addr %s465, 8
      %s467 = scalar_lea.vmem %s12, %s466
      %v468 = vld [vmem:[%s449] sm:$0xff]
      %v469 = vld [vmem:[%s449 + $0x8] sm:$0xff]
      %v470 = vld [vmem:[%s454] sm:$0xff]
      %v471 = vld [vmem:[%s454 + $0x8] sm:$0xff]
      %v472 = vld [vmem:[%s459] sm:$0xff]
      %v473 = vld [vmem:[%s459 + $0x8] sm:$0xff]
      %v474 = vld [vmem:[%s4] sm:$0xff]
      %v475 = vld [vmem:[%s4 + $0x8] sm:$0xff]
      %v476 = vld [vmem:[%s4 + $0x10] sm:$0xff]
      %v477 = vld [vmem:[%s4 + $0x18] sm:$0xff]
      %v478 = vld [vmem:[%s5] sm:$0x1]
      %v480 = vlaneseq
      %v481 = vshrl.u32 %v480, 7
      %v482 = vsub.s32 0, %v481
      %v483 = vrot.slane %v478, %v482
      %vm485 = vcmask 261120
      %v487 = vsel %vm485, %v468, 0
      %v490 = vsel %vm485, %v469, 0
      %492 = vmatprep.subr.mxu0 0.0
      %493 = vmatpush1.msra.mxu0 0.0
      %494 = vmatprep.subr.mxu0 0.0
      %495 = vmatpush1.msra.mxu0 0.0
      %496 = vmatprep.subr.mxu0 0.0
      %497 = vmatpush1.msra.mxu0 0.0
      %498 = vmatprep.subr.mxu0 0.0
      %499 = vmatpush1.msra.mxu0 0.0
      %500 = vmatprep.subr.mxu0 0.0
      %501 = vmatpush1.msra.mxu0 0.0
      %502 = vmatprep.subr.mxu0 0.0
      %503 = vmatpush1.msra.mxu0 0.0
      %504 = vmatprep.subr.mxu0 0.0
      %505 = vmatpush1.msra.mxu0 0.0
      %506 = vmatprep.subr.mxu0 0.0
      %507 = vmatpush1.msra.mxu0 0.0
      %508 = vmatprep.subr.mxu0 0.0
      %509 = vmatpush1.msra.mxu0 0.0
      %510 = vmatprep.subr.mxu0 0.0
      %511 = vmatpush1.msra.mxu0 0.0
      %512 = vmatprep.subr.mxu0 0.0
      %513 = vmatpush1.msra.mxu0 0.0
      %514 = vmatprep.subr.mxu0 0.0
      %515 = vmatpush1.msra.mxu0 0.0
      %516 = vmatprep.subr.mxu0 0.0
      %517 = vmatpush1.msra.mxu0 %v477
      %518 = vmatprep.subr.mxu0 0.0
      %519 = vmatpush1.msra.mxu0 %v476
      %520 = vmatprep.subr.mxu0 0.0
      %521 = vmatpush1.msra.mxu0 %v475
      %522 = vmatprep.subr.mxu0 0.0
      %523 = vmatpush1.msra.mxu0 %v474
      %524 = vmatprep.subr.mxu0 0.0
      %525 = vmatpush2.msra.mxu0 0.0
      %526 = vmatprep.subr.mxu0 0.0
      %527 = vmatpush2.msra.mxu0 0.0
      %528 = vmatprep.subr.mxu0 0.0
      %529 = vmatpush2.msra.mxu0 0.0
      %530 = vmatprep.subr.mxu0 0.0
      %531 = vmatpush2.msra.mxu0 0.0
      %532 = vmatprep.subr.mxu0 0.0
      %533 = vmatpush2.msra.mxu0 0.0
      %534 = vmatprep.subr.mxu0 0.0
      %535 = vmatpush2.msra.mxu0 0.0
      %536 = vmatprep.subr.mxu0 0.0
      %537 = vmatpush2.msra.mxu0 0.0
      %538 = vmatprep.subr.mxu0 0.0
      %539 = vmatpush2.msra.mxu0 0.0
      %540 = vmatprep.subr.mxu0 0.0
      %541 = vmatpush2.msra.mxu0 0.0
      %542 = vmatprep.subr.mxu0 0.0
      %543 = vmatpush2.msra.mxu0 0.0
      %544 = vmatprep.subr.mxu0 0.0
      %545 = vmatpush2.msra.mxu0 0.0
      %546 = vmatprep.subr.mxu0 0.0
      %547 = vmatpush2.msra.mxu0 0.0
      %548 = vmatprep.subr.mxu0 0.0
      %549 = vmatpush2.msra.mxu0 0.0
      %550 = vmatprep.subr.mxu0 0.0
      %551 = vmatpush2.msra.mxu0 0.0
      %552 = vmatprep.subr.mxu0 0.0
      %553 = vmatpush2.msra.mxu0 0.0
      %554 = vmatprep.subr.mxu0 0.0
      %555 = vmatpush2.msra.mxu0 0.0
      %556 = vmatprep.mubr.f32.mxu0 0.0
      %557 = vmatmul.mubr.f32.gmra.mxu0 %v487
      %v558 = vpop.f32.mrf.mxu0
      %v559 = vadd.f32 %v483, %v558
      %v560 = vpop.f32.mrf.mxu0
      %561 = vmatprep.mubr.f32.mxu0 0.0
      %562 = vmatmul.mubr.f32.gmra.mxu0 %v490
      %v563 = vpop.f32.mrf.mxu0
      %v564 = vadd.f32 %v483, %v563
      %v565 = vpop.f32.mrf.mxu0
      %566 = vdwg.mxu0
      %v567 = vld [vmem:[%s6] sm:$0xff]
      %v568 = vld [vmem:[%s6 + $0x8] sm:$0xff]
      %v569 = vld [vmem:[%s6 + $0x10] sm:$0xff]
      %v570 = vld [vmem:[%s6 + $0x18] sm:$0xff]
      %v571 = vld [vmem:[%s7] sm:$0x1]
      %v573 = vlaneseq
      %v574 = vshrl.u32 %v573, 7
      %v575 = vsub.s32 0, %v574
      %v576 = vrot.slane %v571, %v575
      %v579 = vsel %vm485, %v470, 0
      %v582 = vsel %vm485, %v471, 0
      %584 = vmatprep.subr.mxu0 0.0
      %585 = vmatpush1.msra.mxu0 0.0
      %586 = vmatprep.subr.mxu0 0.0
      %587 = vmatpush1.msra.mxu0 0.0
      %588 = vmatprep.subr.mxu0 0.0
      %589 = vmatpush1.msra.mxu0 0.0
      %590 = vmatprep.subr.mxu0 0.0
      %591 = vmatpush1.msra.mxu0 0.0
      %592 = vmatprep.subr.mxu0 0.0
      %593 = vmatpush1.msra.mxu0 0.0
      %594 = vmatprep.subr.mxu0 0.0
      %595 = vmatpush1.msra.mxu0 0.0
      %596 = vmatprep.subr.mxu0 0.0
      %597 = vmatpush1.msra.mxu0 0.0
      %598 = vmatprep.subr.mxu0 0.0
      %599 = vmatpush1.msra.mxu0 0.0
      %600 = vmatprep.subr.mxu0 0.0
      %601 = vmatpush1.msra.mxu0 0.0
      %602 = vmatprep.subr.mxu0 0.0
      %603 = vmatpush1.msra.mxu0 0.0
      %604 = vmatprep.subr.mxu0 0.0
      %605 = vmatpush1.msra.mxu0 0.0
      %606 = vmatprep.subr.mxu0 0.0
      %607 = vmatpush1.msra.mxu0 0.0
      %608 = vmatprep.subr.mxu0 0.0
      %609 = vmatpush1.msra.mxu0 %v570
      %610 = vmatprep.subr.mxu0 0.0
      %611 = vmatpush1.msra.mxu0 %v569
      %612 = vmatprep.subr.mxu0 0.0
      %613 = vmatpush1.msra.mxu0 %v568
      %614 = vmatprep.subr.mxu0 0.0
      %615 = vmatpush1.msra.mxu0 %v567
      %616 = vmatprep.subr.mxu0 0.0
      %617 = vmatpush2.msra.mxu0 0.0
      %618 = vmatprep.subr.mxu0 0.0
      %619 = vmatpush2.msra.mxu0 0.0
      %620 = vmatprep.subr.mxu0 0.0
      %621 = vmatpush2.msra.mxu0 0.0
      %622 = vmatprep.subr.mxu0 0.0
      %623 = vmatpush2.msra.mxu0 0.0
      %624 = vmatprep.subr.mxu0 0.0
      %625 = vmatpush2.msra.mxu0 0.0
      %626 = vmatprep.subr.mxu0 0.0
      %627 = vmatpush2.msra.mxu0 0.0
      %628 = vmatprep.subr.mxu0 0.0
      %629 = vmatpush2.msra.mxu0 0.0
      %630 = vmatprep.subr.mxu0 0.0
      %631 = vmatpush2.msra.mxu0 0.0
      %632 = vmatprep.subr.mxu0 0.0
      %633 = vmatpush2.msra.mxu0 0.0
      %634 = vmatprep.subr.mxu0 0.0
      %635 = vmatpush2.msra.mxu0 0.0
      %636 = vmatprep.subr.mxu0 0.0
      %637 = vmatpush2.msra.mxu0 0.0
      %638 = vmatprep.subr.mxu0 0.0
      %639 = vmatpush2.msra.mxu0 0.0
      %640 = vmatprep.subr.mxu0 0.0
      %641 = vmatpush2.msra.mxu0 0.0
      %642 = vmatprep.subr.mxu0 0.0
      %643 = vmatpush2.msra.mxu0 0.0
      %644 = vmatprep.subr.mxu0 0.0
      %645 = vmatpush2.msra.mxu0 0.0
      %646 = vmatprep.subr.mxu0 0.0
      %647 = vmatpush2.msra.mxu0 0.0
      %648 = vmatprep.mubr.f32.mxu0 0.0
      %649 = vmatmul.mubr.f32.gmra.mxu0 %v579
      %v650 = vpop.f32.mrf.mxu0
      %v651 = vadd.f32 %v576, %v650
      %v652 = vpop.f32.mrf.mxu0
      %653 = vmatprep.mubr.f32.mxu0 0.0
      %654 = vmatmul.mubr.f32.gmra.mxu0 %v582
      %v655 = vpop.f32.mrf.mxu0
      %v656 = vadd.f32 %v576, %v655
      %v657 = vpop.f32.mrf.mxu0
      %658 = vdwg.mxu0
      %v659 = vld [vmem:[%s8] sm:$0xff]
      %v660 = vld [vmem:[%s8 + $0x8] sm:$0xff]
      %v661 = vld [vmem:[%s8 + $0x10] sm:$0xff]
      %v662 = vld [vmem:[%s8 + $0x18] sm:$0xff]
      %v663 = vld [vmem:[%s9] sm:$0x1]
      %v665 = vlaneseq
      %v666 = vshrl.u32 %v665, 7
      %v667 = vsub.s32 0, %v666
      %v668 = vrot.slane %v663, %v667
      %v671 = vsel %vm485, %v472, 0
      %v674 = vsel %vm485, %v473, 0
      %676 = vmatprep.subr.mxu0 0.0
      %677 = vmatpush1.msra.mxu0 0.0
      %678 = vmatprep.subr.mxu0 0.0
      %679 = vmatpush1.msra.mxu0 0.0
      %680 = vmatprep.subr.mxu0 0.0
      %681 = vmatpush1.msra.mxu0 0.0
      %682 = vmatprep.subr.mxu0 0.0
      %683 = vmatpush1.msra.mxu0 0.0
      %684 = vmatprep.subr.mxu0 0.0
      %685 = vmatpush1.msra.mxu0 0.0
      %686 = vmatprep.subr.mxu0 0.0
      %687 = vmatpush1.msra.mxu0 0.0
      %688 = vmatprep.subr.mxu0 0.0
      %689 = vmatpush1.msra.mxu0 0.0
      %690 = vmatprep.subr.mxu0 0.0
      %691 = vmatpush1.msra.mxu0 0.0
      %692 = vmatprep.subr.mxu0 0.0
      %693 = vmatpush1.msra.mxu0 0.0
      %694 = vmatprep.subr.mxu0 0.0
      %695 = vmatpush1.msra.mxu0 0.0
      %696 = vmatprep.subr.mxu0 0.0
      %697 = vmatpush1.msra.mxu0 0.0
      %698 = vmatprep.subr.mxu0 0.0
      %699 = vmatpush1.msra.mxu0 0.0
      %700 = vmatprep.subr.mxu0 0.0
      %701 = vmatpush1.msra.mxu0 %v662
      %702 = vmatprep.subr.mxu0 0.0
      %703 = vmatpush1.msra.mxu0 %v661
      %704 = vmatprep.subr.mxu0 0.0
      %705 = vmatpush1.msra.mxu0 %v660
      %706 = vmatprep.subr.mxu0 0.0
      %707 = vmatpush1.msra.mxu0 %v659
      %708 = vmatprep.subr.mxu0 0.0
      %709 = vmatpush2.msra.mxu0 0.0
      %710 = vmatprep.subr.mxu0 0.0
      %711 = vmatpush2.msra.mxu0 0.0
      %712 = vmatprep.subr.mxu0 0.0
      %713 = vmatpush2.msra.mxu0 0.0
      %714 = vmatprep.subr.mxu0 0.0
      %715 = vmatpush2.msra.mxu0 0.0
      %716 = vmatprep.subr.mxu0 0.0
      %717 = vmatpush2.msra.mxu0 0.0
      %718 = vmatprep.subr.mxu0 0.0
      %719 = vmatpush2.msra.mxu0 0.0
      %720 = vmatprep.subr.mxu0 0.0
      %721 = vmatpush2.msra.mxu0 0.0
      %722 = vmatprep.subr.mxu0 0.0
      %723 = vmatpush2.msra.mxu0 0.0
      %724 = vmatprep.subr.mxu0 0.0
      %725 = vmatpush2.msra.mxu0 0.0
      %726 = vmatprep.subr.mxu0 0.0
      %727 = vmatpush2.msra.mxu0 0.0
      %728 = vmatprep.subr.mxu0 0.0
      %729 = vmatpush2.msra.mxu0 0.0
      %730 = vmatprep.subr.mxu0 0.0
      %731 = vmatpush2.msra.mxu0 0.0
      %732 = vmatprep.subr.mxu0 0.0
      %733 = vmatpush2.msra.mxu0 0.0
      %734 = vmatprep.subr.mxu0 0.0
      %735 = vmatpush2.msra.mxu0 0.0
      %736 = vmatprep.subr.mxu0 0.0
      %737 = vmatpush2.msra.mxu0 0.0
      %738 = vmatprep.subr.mxu0 0.0
      %739 = vmatpush2.msra.mxu0 0.0
      %740 = vmatprep.mubr.f32.mxu0 0.0
      %741 = vmatmul.mubr.f32.gmra.mxu0 %v671
      %v742 = vpop.f32.mrf.mxu0
      %v743 = vadd.f32 %v668, %v742
      %v744 = vpop.f32.mrf.mxu0
      %745 = vmatprep.mubr.f32.mxu0 0.0
      %746 = vmatmul.mubr.f32.gmra.mxu0 %v674
      %v747 = vpop.f32.mrf.mxu0
      %v748 = vadd.f32 %v668, %v747
      %v749 = vpop.f32.mrf.mxu0
      %750 = vdwg.mxu0
      %v751 = vmul.f32 %v559, 0.35355338
      %v752 = vmul.f32 %v564, 0.35355338
      %v753 = vld [vmem:[%s462] sm:$0x1]
      %vm754 = vcmp.gt.f32.partialorder %v753, 0.0
      %v755 = vlaneseq
      %v756 = vshrl.u32 %v755, 7
      %v757 = vadd.s32 %v756, 8
      %v758 = vlaneseq
      %v759 = vand.u32 %v758, 127
      %vm760 = vcmp.gt.s32.totalorder %v759, %v756
      %vm761 = vcmp.gt.s32.totalorder %v759, %v757
      %v762 = vsel %vm754, 1, 0
      %v763 = vlaneseq
      %v764 = vshrl.u32 %v763, 7
      %v765 = vsub.s32 0, %v764
      %v766 = vrot.slane %v762, %v765
      %vm767 = vcmp.eq.s32.totalorder %v766, 1
      %vm768 = vmor %vm767, %vm760
      %vm769 = vmor %vm767, %vm761
      %vm770 = vcmask 64512
      %v772 = vsel %vm770, %v751, 0
      %v775 = vsel %vm770, %v752, 0
      %v778 = vsel %vm770, %v651, 0
      %v781 = vsel %vm770, %v656, 0
      %783 = vmatprep.subr.mxu0 0.0
      %784 = vmatpush1.xpose.msra.mxu0 0.0
      %785 = vmatprep.subr.mxu0 0.0
      %786 = vmatpush1.xpose.msra.mxu0 0.0
      %787 = vmatprep.subr.mxu0 0.0
      %788 = vmatpush1.xpose.msra.mxu0 0.0
      %789 = vmatprep.subr.mxu0 0.0
      %790 = vmatpush1.xpose.msra.mxu0 0.0
      %791 = vmatprep.subr.mxu0 0.0
      %792 = vmatpush1.xpose.msra.mxu0 0.0
      %793 = vmatprep.subr.mxu0 0.0
      %794 = vmatpush1.xpose.msra.mxu0 0.0
      %795 = vmatprep.subr.mxu0 0.0
      %796 = vmatpush1.xpose.msra.mxu0 0.0
      %797 = vmatprep.subr.mxu0 0.0
      %798 = vmatpush1.xpose.msra.mxu0 0.0
      %799 = vmatprep.subr.mxu0 0.0
      %800 = vmatpush1.xpose.msra.mxu0 0.0
      %801 = vmatprep.subr.mxu0 0.0
      %802 = vmatpush1.xpose.msra.mxu0 0.0
      %803 = vmatprep.subr.mxu0 0.0
      %804 = vmatpush1.xpose.msra.mxu0 0.0
      %805 = vmatprep.subr.mxu0 0.0
      %806 = vmatpush1.xpose.msra.mxu0 0.0
      %807 = vmatprep.subr.mxu0 0.0
      %808 = vmatpush1.xpose.msra.mxu0 0.0
      %809 = vmatprep.subr.mxu0 0.0
      %810 = vmatpush1.xpose.msra.mxu0 0.0
      %811 = vmatprep.subr.mxu0 0.0
      %812 = vmatpush1.xpose.msra.mxu0 %v781
      %813 = vmatprep.subr.mxu0 0.0
      %814 = vmatpush1.xpose.msra.mxu0 %v778
      %815 = vmatprep.subr.mxu0 0.0
      %816 = vmatpush2.xpose.msra.mxu0 0.0
      %817 = vmatprep.subr.mxu0 0.0
      %818 = vmatpush2.xpose.msra.mxu0 0.0
      %819 = vmatprep.subr.mxu0 0.0
      %820 = vmatpush2.xpose.msra.mxu0 0.0
      %821 = vmatprep.subr.mxu0 0.0
      %822 = vmatpush2.xpose.msra.mxu0 0.0
      %823 = vmatprep.subr.mxu0 0.0
      %824 = vmatpush2.xpose.msra.mxu0 0.0
      %825 = vmatprep.subr.mxu0 0.0
      %826 = vmatpush2.xpose.msra.mxu0 0.0
      %827 = vmatprep.subr.mxu0 0.0
      %828 = vmatpush2.xpose.msra.mxu0 0.0
      %829 = vmatprep.subr.mxu0 0.0
      %830 = vmatpush2.xpose.msra.mxu0 0.0
      %831 = vmatprep.subr.mxu0 0.0
      %832 = vmatpush2.xpose.msra.mxu0 0.0
      %833 = vmatprep.subr.mxu0 0.0
      %834 = vmatpush2.xpose.msra.mxu0 0.0
      %835 = vmatprep.subr.mxu0 0.0
      %836 = vmatpush2.xpose.msra.mxu0 0.0
      %837 = vmatprep.subr.mxu0 0.0
      %838 = vmatpush2.xpose.msra.mxu0 0.0
      %839 = vmatprep.subr.mxu0 0.0
      %840 = vmatpush2.xpose.msra.mxu0 0.0
      %841 = vmatprep.subr.mxu0 0.0
      %842 = vmatpush2.xpose.msra.mxu0 0.0
      %843 = vmatprep.subr.mxu0 0.0
      %844 = vmatpush2.xpose.msra.mxu0 0.0
      %845 = vmatprep.subr.mxu0 0.0
      %846 = vmatpush2.xpose.msra.mxu0 0.0
      %847 = vmatprep.mubr.f32.mxu0 0.0
      %848 = vmatmul.mubr.f32.gmra.mxu0 %v772
      %v849 = vpop.f32.mrf.mxu0
      %v850 = vadd.f32 0.0, %v849
      %v851 = vpop.f32.mrf.mxu0
      %852 = vmatprep.mubr.f32.mxu0 0.0
      %853 = vmatmul.mubr.f32.gmra.mxu0 %v775
      %v854 = vpop.f32.mrf.mxu0
      %v855 = vadd.f32 0.0, %v854
      %v856 = vpop.f32.mrf.mxu0
      %857 = vdwg.mxu0
      %v858 = vsel %vm768, -1e+30, %v850
      %v859 = vsel %vm769, -1e+30, %v855
      %vm860 = vcmask 130048
      %v861 = vsel %vm860, %v858, -inf
      %862 = vmax.xlane.f32.xlu0 %v861
      %v863 = vpop.xlane.xlu0 %862
      %v864 = vsel %vm860, %v859, -inf
      %865 = vmax.xlane.f32.xlu0 %v864
      %v866 = vpop.xlane.xlu0 %865
      %v867 = vsub.f32 %v858, %v863
      %v868 = vsub.f32 %v859, %v866
      %v869 = vmul.f32 %v867, 1.442695
      %v870 = vpow.pop %v869
      %v871 = vmul.f32 %v868, 1.442695
      %v872 = vpow.pop %v871
      %v873 = vsel %vm860, %v870, 0.0
      %874 = vadd.xlane.f32.xlu0 %v873
      %v875 = vpop.xlane.xlu0 %874
      %v876 = vsel %vm860, %v872, 0.0
      %877 = vadd.xlane.f32.xlu0 %v876
      %v878 = vpop.xlane.xlu0 %877
      %v879 = vrcp.pop %v875
      %v880 = vrcp.pop %v878
      %v881 = vmul.f32 %v870, %v879
      %v882 = vmul.f32 %v872, %v880
      %v884 = vsel %vm860, %v881, 0
      %v887 = vsel %vm860, %v882, 0
      %889 = vmatprep.subr.mxu0 0.0
      %890 = vmatpush1.msra.mxu0 0.0
      %891 = vmatprep.subr.mxu0 0.0
      %892 = vmatpush1.msra.mxu0 0.0
      %893 = vmatprep.subr.mxu0 0.0
      %894 = vmatpush1.msra.mxu0 0.0
      %895 = vmatprep.subr.mxu0 0.0
      %896 = vmatpush1.msra.mxu0 0.0
      %897 = vmatprep.subr.mxu0 0.0
      %898 = vmatpush1.msra.mxu0 0.0
      %899 = vmatprep.subr.mxu0 0.0
      %900 = vmatpush1.msra.mxu0 0.0
      %901 = vmatprep.subr.mxu0 0.0
      %902 = vmatpush1.msra.mxu0 0.0
      %903 = vmatprep.subr.mxu0 0.0
      %904 = vmatpush1.msra.mxu0 0.0
      %905 = vmatprep.subr.mxu0 0.0
      %906 = vmatpush1.msra.mxu0 0.0
      %907 = vmatprep.subr.mxu0 0.0
      %908 = vmatpush1.msra.mxu0 0.0
      %909 = vmatprep.subr.mxu0 0.0
      %910 = vmatpush1.msra.mxu0 0.0
      %911 = vmatprep.subr.mxu0 0.0
      %912 = vmatpush1.msra.mxu0 0.0
      %913 = vmatprep.subr.mxu0 0.0
      %914 = vmatpush1.msra.mxu0 0.0
      %915 = vmatprep.subr.mxu0 0.0
      %916 = vmatpush1.msra.mxu0 0.0
      %917 = vmatprep.subr.mxu0 0.0
      %918 = vmatpush1.msra.mxu0 %v748
      %919 = vmatprep.subr.mxu0 0.0
      %920 = vmatpush1.msra.mxu0 %v743
      %921 = vmatprep.subr.mxu0 0.0
      %922 = vmatpush2.msra.mxu0 0.0
      %923 = vmatprep.subr.mxu0 0.0
      %924 = vmatpush2.msra.mxu0 0.0
      %925 = vmatprep.subr.mxu0 0.0
      %926 = vmatpush2.msra.mxu0 0.0
      %927 = vmatprep.subr.mxu0 0.0
      %928 = vmatpush2.msra.mxu0 0.0
      %929 = vmatprep.subr.mxu0 0.0
      %930 = vmatpush2.msra.mxu0 0.0
      %931 = vmatprep.subr.mxu0 0.0
      %932 = vmatpush2.msra.mxu0 0.0
      %933 = vmatprep.subr.mxu0 0.0
      %934 = vmatpush2.msra.mxu0 0.0
      %935 = vmatprep.subr.mxu0 0.0
      %936 = vmatpush2.msra.mxu0 0.0
      %937 = vmatprep.subr.mxu0 0.0
      %938 = vmatpush2.msra.mxu0 0.0
      %939 = vmatprep.subr.mxu0 0.0
      %940 = vmatpush2.msra.mxu0 0.0
      %941 = vmatprep.subr.mxu0 0.0
      %942 = vmatpush2.msra.mxu0 0.0
      %943 = vmatprep.subr.mxu0 0.0
      %944 = vmatpush2.msra.mxu0 0.0
      %945 = vmatprep.subr.mxu0 0.0
      %946 = vmatpush2.msra.mxu0 0.0
      %947 = vmatprep.subr.mxu0 0.0
      %948 = vmatpush2.msra.mxu0 0.0
      %949 = vmatprep.subr.mxu0 0.0
      %950 = vmatpush2.msra.mxu0 0.0
      %951 = vmatprep.subr.mxu0 0.0
      %952 = vmatpush2.msra.mxu0 0.0
      %953 = vmatprep.mubr.f32.mxu0 0.0
      %954 = vmatmul.mubr.f32.gmra.mxu0 %v884
      %v955 = vpop.f32.mrf.mxu0
      %v956 = vadd.f32 0.0, %v955
      %v957 = vpop.f32.mrf.mxu0
      %958 = vmatprep.mubr.f32.mxu0 0.0
      %959 = vmatmul.mubr.f32.gmra.mxu0 %v887
      %v960 = vpop.f32.mrf.mxu0
      %v961 = vadd.f32 0.0, %v960
      %v962 = vpop.f32.mrf.mxu0
      %963 = vdwg.mxu0
      %964 = vrot.lane.b32.xlu0 %v751, 120
      %v965 = vpop.permute.xlu0 %964
      %966 = vrot.lane.b32.xlu0 %v752, 120
      %v967 = vpop.permute.xlu0 %966
      %968 = vrot.lane.b32.xlu0 %v651, 120
      %v969 = vpop.permute.xlu0 %968
      %970 = vrot.lane.b32.xlu0 %v656, 120
      %v971 = vpop.permute.xlu0 %970
      %v972 = vsel %vm770, %v965, 0
      %v974 = vsel %vm770, %v967, 0
      %v976 = vsel %vm770, %v969, 0
      %v978 = vsel %vm770, %v971, 0
      %980 = vmatprep.subr.mxu0 0.0
      %981 = vmatpush1.xpose.msra.mxu0 0.0
      %982 = vmatprep.subr.mxu0 0.0
      %983 = vmatpush1.xpose.msra.mxu0 0.0
      %984 = vmatprep.subr.mxu0 0.0
      %985 = vmatpush1.xpose.msra.mxu0 0.0
      %986 = vmatprep.subr.mxu0 0.0
      %987 = vmatpush1.xpose.msra.mxu0 0.0
      %988 = vmatprep.subr.mxu0 0.0
      %989 = vmatpush1.xpose.msra.mxu0 0.0
      %990 = vmatprep.subr.mxu0 0.0
      %991 = vmatpush1.xpose.msra.mxu0 0.0
      %992 = vmatprep.subr.mxu0 0.0
      %993 = vmatpush1.xpose.msra.mxu0 0.0
      %994 = vmatprep.subr.mxu0 0.0
      %995 = vmatpush1.xpose.msra.mxu0 0.0
      %996 = vmatprep.subr.mxu0 0.0
      %997 = vmatpush1.xpose.msra.mxu0 0.0
      %998 = vmatprep.subr.mxu0 0.0
      %999 = vmatpush1.xpose.msra.mxu0 0.0
      %1000 = vmatprep.subr.mxu0 0.0
      %1001 = vmatpush1.xpose.msra.mxu0 0.0
      %1002 = vmatprep.subr.mxu0 0.0
      %1003 = vmatpush1.xpose.msra.mxu0 0.0
      %1004 = vmatprep.subr.mxu0 0.0
      %1005 = vmatpush1.xpose.msra.mxu0 0.0
      %1006 = vmatprep.subr.mxu0 0.0
      %1007 = vmatpush1.xpose.msra.mxu0 0.0
      %1008 = vmatprep.subr.mxu0 0.0
      %1009 = vmatpush1.xpose.msra.mxu0 %v978
      %1010 = vmatprep.subr.mxu0 0.0
      %1011 = vmatpush1.xpose.msra.mxu0 %v976
      %1012 = vmatprep.subr.mxu0 0.0
      %1013 = vmatpush2.xpose.msra.mxu0 0.0
      %1014 = vmatprep.subr.mxu0 0.0
      %1015 = vmatpush2.xpose.msra.mxu0 0.0
      %1016 = vmatprep.subr.mxu0 0.0
      %1017 = vmatpush2.xpose.msra.mxu0 0.0
      %1018 = vmatprep.subr.mxu0 0.0
      %1019 = vmatpush2.xpose.msra.mxu0 0.0
      %1020 = vmatprep.subr.mxu0 0.0
      %1021 = vmatpush2.xpose.msra.mxu0 0.0
      %1022 = vmatprep.subr.mxu0 0.0
      %1023 = vmatpush2.xpose.msra.mxu0 0.0
      %1024 = vmatprep.subr.mxu0 0.0
      %1025 = vmatpush2.xpose.msra.mxu0 0.0
      %1026 = vmatprep.subr.mxu0 0.0
      %1027 = vmatpush2.xpose.msra.mxu0 0.0
      %1028 = vmatprep.subr.mxu0 0.0
      %1029 = vmatpush2.xpose.msra.mxu0 0.0
      %1030 = vmatprep.subr.mxu0 0.0
      %1031 = vmatpush2.xpose.msra.mxu0 0.0
      %1032 = vmatprep.subr.mxu0 0.0
      %1033 = vmatpush2.xpose.msra.mxu0 0.0
      %1034 = vmatprep.subr.mxu0 0.0
      %1035 = vmatpush2.xpose.msra.mxu0 0.0
      %1036 = vmatprep.subr.mxu0 0.0
      %1037 = vmatpush2.xpose.msra.mxu0 0.0
      %1038 = vmatprep.subr.mxu0 0.0
      %1039 = vmatpush2.xpose.msra.mxu0 0.0
      %1040 = vmatprep.subr.mxu0 0.0
      %1041 = vmatpush2.xpose.msra.mxu0 0.0
      %1042 = vmatprep.subr.mxu0 0.0
      %1043 = vmatpush2.xpose.msra.mxu0 0.0
      %1044 = vmatprep.mubr.f32.mxu0 0.0
      %1045 = vmatmul.mubr.f32.gmra.mxu0 %v972
      %v1046 = vpop.f32.mrf.mxu0
      %v1047 = vadd.f32 0.0, %v1046
      %v1048 = vpop.f32.mrf.mxu0
      %1049 = vmatprep.mubr.f32.mxu0 0.0
      %1050 = vmatmul.mubr.f32.gmra.mxu0 %v974
      %v1051 = vpop.f32.mrf.mxu0
      %v1052 = vadd.f32 0.0, %v1051
      %v1053 = vpop.f32.mrf.mxu0
      %1054 = vdwg.mxu0
      %v1055 = vsel %vm768, -1e+30, %v1047
      %v1056 = vsel %vm769, -1e+30, %v1052
      %v1057 = vsel %vm860, %v1055, -inf
      %1058 = vmax.xlane.f32.xlu0 %v1057
      %v1059 = vpop.xlane.xlu0 %1058
      %v1060 = vsel %vm860, %v1056, -inf
      %1061 = vmax.xlane.f32.xlu0 %v1060
      %v1062 = vpop.xlane.xlu0 %1061
      %v1063 = vsub.f32 %v1055, %v1059
      %v1064 = vsub.f32 %v1056, %v1062
      %v1065 = vmul.f32 %v1063, 1.442695
      %v1066 = vpow.pop %v1065
      %v1067 = vmul.f32 %v1064, 1.442695
      %v1068 = vpow.pop %v1067
      %v1069 = vsel %vm860, %v1066, 0.0
      %1070 = vadd.xlane.f32.xlu0 %v1069
      %v1071 = vpop.xlane.xlu0 %1070
      %v1072 = vsel %vm860, %v1068, 0.0
      %1073 = vadd.xlane.f32.xlu0 %v1072
      %v1074 = vpop.xlane.xlu0 %1073
      %v1075 = vrcp.pop %v1071
      %v1076 = vrcp.pop %v1074
      %v1077 = vmul.f32 %v1066, %v1075
      %v1078 = vmul.f32 %v1068, %v1076
      %1081 = vrot.lane.b32.xlu0 %v743, 120
      %v1082 = vpop.permute.xlu0 %1081
      %1083 = vrot.lane.b32.xlu0 %v748, 120
      %v1084 = vpop.permute.xlu0 %1083
      %v1088 = vsel %vm860, %v1077, 0
      %v1091 = vsel %vm860, %v1078, 0
      %1093 = vmatprep.subr.mxu0 0.0
      %1094 = vmatpush1.msra.mxu0 0.0
      %1095 = vmatprep.subr.mxu0 0.0
      %1096 = vmatpush1.msra.mxu0 0.0
      %1097 = vmatprep.subr.mxu0 0.0
      %1098 = vmatpush1.msra.mxu0 0.0
      %1099 = vmatprep.subr.mxu0 0.0
      %1100 = vmatpush1.msra.mxu0 0.0
      %1101 = vmatprep.subr.mxu0 0.0
      %1102 = vmatpush1.msra.mxu0 0.0
      %1103 = vmatprep.subr.mxu0 0.0
      %1104 = vmatpush1.msra.mxu0 0.0
      %1105 = vmatprep.subr.mxu0 0.0
      %1106 = vmatpush1.msra.mxu0 0.0
      %1107 = vmatprep.subr.mxu0 0.0
      %1108 = vmatpush1.msra.mxu0 0.0
      %1109 = vmatprep.subr.mxu0 0.0
      %1110 = vmatpush1.msra.mxu0 0.0
      %1111 = vmatprep.subr.mxu0 0.0
      %1112 = vmatpush1.msra.mxu0 0.0
      %1113 = vmatprep.subr.mxu0 0.0
      %1114 = vmatpush1.msra.mxu0 0.0
      %1115 = vmatprep.subr.mxu0 0.0
      %1116 = vmatpush1.msra.mxu0 0.0
      %1117 = vmatprep.subr.mxu0 0.0
      %1118 = vmatpush1.msra.mxu0 0.0
      %1119 = vmatprep.subr.mxu0 0.0
      %1120 = vmatpush1.msra.mxu0 0.0
      %1121 = vmatprep.subr.mxu0 0.0
      %1122 = vmatpush1.msra.mxu0 %v1084
      %1123 = vmatprep.subr.mxu0 0.0
      %1124 = vmatpush1.msra.mxu0 %v1082
      %1125 = vmatprep.subr.mxu0 0.0
      %1126 = vmatpush2.msra.mxu0 0.0
      %1127 = vmatprep.subr.mxu0 0.0
      %1128 = vmatpush2.msra.mxu0 0.0
      %1129 = vmatprep.subr.mxu0 0.0
      %1130 = vmatpush2.msra.mxu0 0.0
      %1131 = vmatprep.subr.mxu0 0.0
      %1132 = vmatpush2.msra.mxu0 0.0
      %1133 = vmatprep.subr.mxu0 0.0
      %1134 = vmatpush2.msra.mxu0 0.0
      %1135 = vmatprep.subr.mxu0 0.0
      %1136 = vmatpush2.msra.mxu0 0.0
      %1137 = vmatprep.subr.mxu0 0.0
      %1138 = vmatpush2.msra.mxu0 0.0
      %1139 = vmatprep.subr.mxu0 0.0
      %1140 = vmatpush2.msra.mxu0 0.0
      %1141 = vmatprep.subr.mxu0 0.0
      %1142 = vmatpush2.msra.mxu0 0.0
      %1143 = vmatprep.subr.mxu0 0.0
      %1144 = vmatpush2.msra.mxu0 0.0
      %1145 = vmatprep.subr.mxu0 0.0
      %1146 = vmatpush2.msra.mxu0 0.0
      %1147 = vmatprep.subr.mxu0 0.0
      %1148 = vmatpush2.msra.mxu0 0.0
      %1149 = vmatprep.subr.mxu0 0.0
      %1150 = vmatpush2.msra.mxu0 0.0
      %1151 = vmatprep.subr.mxu0 0.0
      %1152 = vmatpush2.msra.mxu0 0.0
      %1153 = vmatprep.subr.mxu0 0.0
      %1154 = vmatpush2.msra.mxu0 0.0
      %1155 = vmatprep.subr.mxu0 0.0
      %1156 = vmatpush2.msra.mxu0 0.0
      %1157 = vmatprep.mubr.f32.mxu0 0.0
      %1158 = vmatmul.mubr.f32.gmra.mxu0 %v1088
      %v1159 = vpop.f32.mrf.mxu0
      %v1160 = vadd.f32 0.0, %v1159
      %v1161 = vpop.f32.mrf.mxu0
      %1162 = vmatprep.mubr.f32.mxu0 0.0
      %1163 = vmatmul.mubr.f32.gmra.mxu0 %v1091
      %v1164 = vpop.f32.mrf.mxu0
      %v1165 = vadd.f32 0.0, %v1164
      %v1166 = vpop.f32.mrf.mxu0
      %1167 = vdwg.mxu0
      %1168 = vrot.lane.b32.xlu0 %v751, 112
      %v1169 = vpop.permute.xlu0 %1168
      %1170 = vrot.lane.b32.xlu0 %v752, 112
      %v1171 = vpop.permute.xlu0 %1170
      %1172 = vrot.lane.b32.xlu0 %v651, 112
      %v1173 = vpop.permute.xlu0 %1172
      %1174 = vrot.lane.b32.xlu0 %v656, 112
      %v1175 = vpop.permute.xlu0 %1174
      %v1176 = vsel %vm770, %v1169, 0
      %v1178 = vsel %vm770, %v1171, 0
      %v1180 = vsel %vm770, %v1173, 0
      %v1182 = vsel %vm770, %v1175, 0
      %1184 = vmatprep.subr.mxu0 0.0
      %1185 = vmatpush1.xpose.msra.mxu0 0.0
      %1186 = vmatprep.subr.mxu0 0.0
      %1187 = vmatpush1.xpose.msra.mxu0 0.0
      %1188 = vmatprep.subr.mxu0 0.0
      %1189 = vmatpush1.xpose.msra.mxu0 0.0
      %1190 = vmatprep.subr.mxu0 0.0
      %1191 = vmatpush1.xpose.msra.mxu0 0.0
      %1192 = vmatprep.subr.mxu0 0.0
      %1193 = vmatpush1.xpose.msra.mxu0 0.0
      %1194 = vmatprep.subr.mxu0 0.0
      %1195 = vmatpush1.xpose.msra.mxu0 0.0
      %1196 = vmatprep.subr.mxu0 0.0
      %1197 = vmatpush1.xpose.msra.mxu0 0.0
      %1198 = vmatprep.subr.mxu0 0.0
      %1199 = vmatpush1.xpose.msra.mxu0 0.0
      %1200 = vmatprep.subr.mxu0 0.0
      %1201 = vmatpush1.xpose.msra.mxu0 0.0
      %1202 = vmatprep.subr.mxu0 0.0
      %1203 = vmatpush1.xpose.msra.mxu0 0.0
      %1204 = vmatprep.subr.mxu0 0.0
      %1205 = vmatpush1.xpose.msra.mxu0 0.0
      %1206 = vmatprep.subr.mxu0 0.0
      %1207 = vmatpush1.xpose.msra.mxu0 0.0
      %1208 = vmatprep.subr.mxu0 0.0
      %1209 = vmatpush1.xpose.msra.mxu0 0.0
      %1210 = vmatprep.subr.mxu0 0.0
      %1211 = vmatpush1.xpose.msra.mxu0 0.0
      %1212 = vmatprep.subr.mxu0 0.0
      %1213 = vmatpush1.xpose.msra.mxu0 %v1182
      %1214 = vmatprep.subr.mxu0 0.0
      %1215 = vmatpush1.xpose.msra.mxu0 %v1180
      %1216 = vmatprep.subr.mxu0 0.0
      %1217 = vmatpush2.xpose.msra.mxu0 0.0
      %1218 = vmatprep.subr.mxu0 0.0
      %1219 = vmatpush2.xpose.msra.mxu0 0.0
      %1220 = vmatprep.subr.mxu0 0.0
      %1221 = vmatpush2.xpose.msra.mxu0 0.0
      %1222 = vmatprep.subr.mxu0 0.0
      %1223 = vmatpush2.xpose.msra.mxu0 0.0
      %1224 = vmatprep.subr.mxu0 0.0
      %1225 = vmatpush2.xpose.msra.mxu0 0.0
      %1226 = vmatprep.subr.mxu0 0.0
      %1227 = vmatpush2.xpose.msra.mxu0 0.0
      %1228 = vmatprep.subr.mxu0 0.0
      %1229 = vmatpush2.xpose.msra.mxu0 0.0
      %1230 = vmatprep.subr.mxu0 0.0
      %1231 = vmatpush2.xpose.msra.mxu0 0.0
      %1232 = vmatprep.subr.mxu0 0.0
      %1233 = vmatpush2.xpose.msra.mxu0 0.0
      %1234 = vmatprep.subr.mxu0 0.0
      %1235 = vmatpush2.xpose.msra.mxu0 0.0
      %1236 = vmatprep.subr.mxu0 0.0
      %1237 = vmatpush2.xpose.msra.mxu0 0.0
      %1238 = vmatprep.subr.mxu0 0.0
      %1239 = vmatpush2.xpose.msra.mxu0 0.0
      %1240 = vmatprep.subr.mxu0 0.0
      %1241 = vmatpush2.xpose.msra.mxu0 0.0
      %1242 = vmatprep.subr.mxu0 0.0
      %1243 = vmatpush2.xpose.msra.mxu0 0.0
      %1244 = vmatprep.subr.mxu0 0.0
      %1245 = vmatpush2.xpose.msra.mxu0 0.0
      %1246 = vmatprep.subr.mxu0 0.0
      %1247 = vmatpush2.xpose.msra.mxu0 0.0
      %1248 = vmatprep.mubr.f32.mxu0 0.0
      %1249 = vmatmul.mubr.f32.gmra.mxu0 %v1176
      %v1250 = vpop.f32.mrf.mxu0
      %v1251 = vadd.f32 0.0, %v1250
      %v1252 = vpop.f32.mrf.mxu0
      %1253 = vmatprep.mubr.f32.mxu0 0.0
      %1254 = vmatmul.mubr.f32.gmra.mxu0 %v1178
      %v1255 = vpop.f32.mrf.mxu0
      %v1256 = vadd.f32 0.0, %v1255
      %v1257 = vpop.f32.mrf.mxu0
      %1258 = vdwg.mxu0
      %v1259 = vsel %vm768, -1e+30, %v1251
      %v1260 = vsel %vm769, -1e+30, %v1256
      %v1261 = vsel %vm860, %v1259, -inf
      %1262 = vmax.xlane.f32.xlu0 %v1261
      %v1263 = vpop.xlane.xlu0 %1262
      %v1264 = vsel %vm860, %v1260, -inf
      %1265 = vmax.xlane.f32.xlu0 %v1264
      %v1266 = vpop.xlane.xlu0 %1265
      %v1267 = vsub.f32 %v1259, %v1263
      %v1268 = vsub.f32 %v1260, %v1266
      %v1269 = vmul.f32 %v1267, 1.442695
      %v1270 = vpow.pop %v1269
      %v1271 = vmul.f32 %v1268, 1.442695
      %v1272 = vpow.pop %v1271
      %v1273 = vsel %vm860, %v1270, 0.0
      %1274 = vadd.xlane.f32.xlu0 %v1273
      %v1275 = vpop.xlane.xlu0 %1274
      %v1276 = vsel %vm860, %v1272, 0.0
      %1277 = vadd.xlane.f32.xlu0 %v1276
      %v1278 = vpop.xlane.xlu0 %1277
      %v1279 = vrcp.pop %v1275
      %v1280 = vrcp.pop %v1278
      %v1281 = vmul.f32 %v1270, %v1279
      %v1282 = vmul.f32 %v1272, %v1280
      %1283 = vrot.lane.b32.xlu0 %v743, 112
      %v1284 = vpop.permute.xlu0 %1283
      %1285 = vrot.lane.b32.xlu0 %v748, 112
      %v1286 = vpop.permute.xlu0 %1285
      %v1290 = vsel %vm860, %v1281, 0
      %v1293 = vsel %vm860, %v1282, 0
      %1295 = vmatprep.subr.mxu0 0.0
      %1296 = vmatpush1.msra.mxu0 0.0
      %1297 = vmatprep.subr.mxu0 0.0
      %1298 = vmatpush1.msra.mxu0 0.0
      %1299 = vmatprep.subr.mxu0 0.0
      %1300 = vmatpush1.msra.mxu0 0.0
      %1301 = vmatprep.subr.mxu0 0.0
      %1302 = vmatpush1.msra.mxu0 0.0
      %1303 = vmatprep.subr.mxu0 0.0
      %1304 = vmatpush1.msra.mxu0 0.0
      %1305 = vmatprep.subr.mxu0 0.0
      %1306 = vmatpush1.msra.mxu0 0.0
      %1307 = vmatprep.subr.mxu0 0.0
      %1308 = vmatpush1.msra.mxu0 0.0
      %1309 = vmatprep.subr.mxu0 0.0
      %1310 = vmatpush1.msra.mxu0 0.0
      %1311 = vmatprep.subr.mxu0 0.0
      %1312 = vmatpush1.msra.mxu0 0.0
      %1313 = vmatprep.subr.mxu0 0.0
      %1314 = vmatpush1.msra.mxu0 0.0
      %1315 = vmatprep.subr.mxu0 0.0
      %1316 = vmatpush1.msra.mxu0 0.0
      %1317 = vmatprep.subr.mxu0 0.0
      %1318 = vmatpush1.msra.mxu0 0.0
      %1319 = vmatprep.subr.mxu0 0.0
      %1320 = vmatpush1.msra.mxu0 0.0
      %1321 = vmatprep.subr.mxu0 0.0
      %1322 = vmatpush1.msra.mxu0 0.0
      %1323 = vmatprep.subr.mxu0 0.0
      %1324 = vmatpush1.msra.mxu0 %v1286
      %1325 = vmatprep.subr.mxu0 0.0
      %1326 = vmatpush1.msra.mxu0 %v1284
      %1327 = vmatprep.subr.mxu0 0.0
      %1328 = vmatpush2.msra.mxu0 0.0
      %1329 = vmatprep.subr.mxu0 0.0
      %1330 = vmatpush2.msra.mxu0 0.0
      %1331 = vmatprep.subr.mxu0 0.0
      %1332 = vmatpush2.msra.mxu0 0.0
      %1333 = vmatprep.subr.mxu0 0.0
      %1334 = vmatpush2.msra.mxu0 0.0
      %1335 = vmatprep.subr.mxu0 0.0
      %1336 = vmatpush2.msra.mxu0 0.0
      %1337 = vmatprep.subr.mxu0 0.0
      %1338 = vmatpush2.msra.mxu0 0.0
      %1339 = vmatprep.subr.mxu0 0.0
      %1340 = vmatpush2.msra.mxu0 0.0
      %1341 = vmatprep.subr.mxu0 0.0
      %1342 = vmatpush2.msra.mxu0 0.0
      %1343 = vmatprep.subr.mxu0 0.0
      %1344 = vmatpush2.msra.mxu0 0.0
      %1345 = vmatprep.subr.mxu0 0.0
      %1346 = vmatpush2.msra.mxu0 0.0
      %1347 = vmatprep.subr.mxu0 0.0
      %1348 = vmatpush2.msra.mxu0 0.0
      %1349 = vmatprep.subr.mxu0 0.0
      %1350 = vmatpush2.msra.mxu0 0.0
      %1351 = vmatprep.subr.mxu0 0.0
      %1352 = vmatpush2.msra.mxu0 0.0
      %1353 = vmatprep.subr.mxu0 0.0
      %1354 = vmatpush2.msra.mxu0 0.0
      %1355 = vmatprep.subr.mxu0 0.0
      %1356 = vmatpush2.msra.mxu0 0.0
      %1357 = vmatprep.subr.mxu0 0.0
      %1358 = vmatpush2.msra.mxu0 0.0
      %1359 = vmatprep.mubr.f32.mxu0 0.0
      %1360 = vmatmul.mubr.f32.gmra.mxu0 %v1290
      %v1361 = vpop.f32.mrf.mxu0
      %v1362 = vadd.f32 0.0, %v1361
      %v1363 = vpop.f32.mrf.mxu0
      %1364 = vmatprep.mubr.f32.mxu0 0.0
      %1365 = vmatmul.mubr.f32.gmra.mxu0 %v1293
      %v1366 = vpop.f32.mrf.mxu0
      %v1367 = vadd.f32 0.0, %v1366
      %v1368 = vpop.f32.mrf.mxu0
      %1369 = vdwg.mxu0
      %1370 = vrot.lane.b32.xlu0 %v751, 104
      %v1371 = vpop.permute.xlu0 %1370
      %1372 = vrot.lane.b32.xlu0 %v752, 104
      %v1373 = vpop.permute.xlu0 %1372
      %1374 = vrot.lane.b32.xlu0 %v651, 104
      %v1375 = vpop.permute.xlu0 %1374
      %1376 = vrot.lane.b32.xlu0 %v656, 104
      %v1377 = vpop.permute.xlu0 %1376
      %v1378 = vsel %vm770, %v1371, 0
      %v1380 = vsel %vm770, %v1373, 0
      %v1382 = vsel %vm770, %v1375, 0
      %v1384 = vsel %vm770, %v1377, 0
      %1386 = vmatprep.subr.mxu0 0.0
      %1387 = vmatpush1.xpose.msra.mxu0 0.0
      %1388 = vmatprep.subr.mxu0 0.0
      %1389 = vmatpush1.xpose.msra.mxu0 0.0
      %1390 = vmatprep.subr.mxu0 0.0
      %1391 = vmatpush1.xpose.msra.mxu0 0.0
      %1392 = vmatprep.subr.mxu0 0.0
      %1393 = vmatpush1.xpose.msra.mxu0 0.0
      %1394 = vmatprep.subr.mxu0 0.0
      %1395 = vmatpush1.xpose.msra.mxu0 0.0
      %1396 = vmatprep.subr.mxu0 0.0
      %1397 = vmatpush1.xpose.msra.mxu0 0.0
      %1398 = vmatprep.subr.mxu0 0.0
      %1399 = vmatpush1.xpose.msra.mxu0 0.0
      %1400 = vmatprep.subr.mxu0 0.0
      %1401 = vmatpush1.xpose.msra.mxu0 0.0
      %1402 = vmatprep.subr.mxu0 0.0
      %1403 = vmatpush1.xpose.msra.mxu0 0.0
      %1404 = vmatprep.subr.mxu0 0.0
      %1405 = vmatpush1.xpose.msra.mxu0 0.0
      %1406 = vmatprep.subr.mxu0 0.0
      %1407 = vmatpush1.xpose.msra.mxu0 0.0
      %1408 = vmatprep.subr.mxu0 0.0
      %1409 = vmatpush1.xpose.msra.mxu0 0.0
      %1410 = vmatprep.subr.mxu0 0.0
      %1411 = vmatpush1.xpose.msra.mxu0 0.0
      %1412 = vmatprep.subr.mxu0 0.0
      %1413 = vmatpush1.xpose.msra.mxu0 0.0
      %1414 = vmatprep.subr.mxu0 0.0
      %1415 = vmatpush1.xpose.msra.mxu0 %v1384
      %1416 = vmatprep.subr.mxu0 0.0
      %1417 = vmatpush1.xpose.msra.mxu0 %v1382
      %1418 = vmatprep.subr.mxu0 0.0
      %1419 = vmatpush2.xpose.msra.mxu0 0.0
      %1420 = vmatprep.subr.mxu0 0.0
      %1421 = vmatpush2.xpose.msra.mxu0 0.0
      %1422 = vmatprep.subr.mxu0 0.0
      %1423 = vmatpush2.xpose.msra.mxu0 0.0
      %1424 = vmatprep.subr.mxu0 0.0
      %1425 = vmatpush2.xpose.msra.mxu0 0.0
      %1426 = vmatprep.subr.mxu0 0.0
      %1427 = vmatpush2.xpose.msra.mxu0 0.0
      %1428 = vmatprep.subr.mxu0 0.0
      %1429 = vmatpush2.xpose.msra.mxu0 0.0
      %1430 = vmatprep.subr.mxu0 0.0
      %1431 = vmatpush2.xpose.msra.mxu0 0.0
      %1432 = vmatprep.subr.mxu0 0.0
      %1433 = vmatpush2.xpose.msra.mxu0 0.0
      %1434 = vmatprep.subr.mxu0 0.0
      %1435 = vmatpush2.xpose.msra.mxu0 0.0
      %1436 = vmatprep.subr.mxu0 0.0
      %1437 = vmatpush2.xpose.msra.mxu0 0.0
      %1438 = vmatprep.subr.mxu0 0.0
      %1439 = vmatpush2.xpose.msra.mxu0 0.0
      %1440 = vmatprep.subr.mxu0 0.0
      %1441 = vmatpush2.xpose.msra.mxu0 0.0
      %1442 = vmatprep.subr.mxu0 0.0
      %1443 = vmatpush2.xpose.msra.mxu0 0.0
      %1444 = vmatprep.subr.mxu0 0.0
      %1445 = vmatpush2.xpose.msra.mxu0 0.0
      %1446 = vmatprep.subr.mxu0 0.0
      %1447 = vmatpush2.xpose.msra.mxu0 0.0
      %1448 = vmatprep.subr.mxu0 0.0
      %1449 = vmatpush2.xpose.msra.mxu0 0.0
      %1450 = vmatprep.mubr.f32.mxu0 0.0
      %1451 = vmatmul.mubr.f32.gmra.mxu0 %v1378
      %v1452 = vpop.f32.mrf.mxu0
      %v1453 = vadd.f32 0.0, %v1452
      %v1454 = vpop.f32.mrf.mxu0
      %1455 = vmatprep.mubr.f32.mxu0 0.0
      %1456 = vmatmul.mubr.f32.gmra.mxu0 %v1380
      %v1457 = vpop.f32.mrf.mxu0
      %v1458 = vadd.f32 0.0, %v1457
      %v1459 = vpop.f32.mrf.mxu0
      %1460 = vdwg.mxu0
      %v1461 = vsel %vm768, -1e+30, %v1453
      %v1462 = vsel %vm769, -1e+30, %v1458
      %v1463 = vsel %vm860, %v1461, -inf
      %1464 = vmax.xlane.f32.xlu0 %v1463
      %v1465 = vpop.xlane.xlu0 %1464
      %v1466 = vsel %vm860, %v1462, -inf
      %1467 = vmax.xlane.f32.xlu0 %v1466
      %v1468 = vpop.xlane.xlu0 %1467
      %v1469 = vsub.f32 %v1461, %v1465
      %v1470 = vsub.f32 %v1462, %v1468
      %v1471 = vmul.f32 %v1469, 1.442695
      %v1472 = vpow.pop %v1471
      %v1473 = vmul.f32 %v1470, 1.442695
      %v1474 = vpow.pop %v1473
      %v1475 = vsel %vm860, %v1472, 0.0
      %1476 = vadd.xlane.f32.xlu0 %v1475
      %v1477 = vpop.xlane.xlu0 %1476
      %v1478 = vsel %vm860, %v1474, 0.0
      %1479 = vadd.xlane.f32.xlu0 %v1478
      %v1480 = vpop.xlane.xlu0 %1479
      %v1481 = vrcp.pop %v1477
      %v1482 = vrcp.pop %v1480
      %v1483 = vmul.f32 %v1472, %v1481
      %v1484 = vmul.f32 %v1474, %v1482
      %1485 = vrot.lane.b32.xlu0 %v743, 104
      %v1486 = vpop.permute.xlu0 %1485
      %1487 = vrot.lane.b32.xlu0 %v748, 104
      %v1488 = vpop.permute.xlu0 %1487
      %v1492 = vsel %vm860, %v1483, 0
      %v1495 = vsel %vm860, %v1484, 0
      %1497 = vmatprep.subr.mxu0 0.0
      %1498 = vmatpush1.msra.mxu0 0.0
      %1499 = vmatprep.subr.mxu0 0.0
      %1500 = vmatpush1.msra.mxu0 0.0
      %1501 = vmatprep.subr.mxu0 0.0
      %1502 = vmatpush1.msra.mxu0 0.0
      %1503 = vmatprep.subr.mxu0 0.0
      %1504 = vmatpush1.msra.mxu0 0.0
      %1505 = vmatprep.subr.mxu0 0.0
      %1506 = vmatpush1.msra.mxu0 0.0
      %1507 = vmatprep.subr.mxu0 0.0
      %1508 = vmatpush1.msra.mxu0 0.0
      %1509 = vmatprep.subr.mxu0 0.0
      %1510 = vmatpush1.msra.mxu0 0.0
      %1511 = vmatprep.subr.mxu0 0.0
      %1512 = vmatpush1.msra.mxu0 0.0
      %1513 = vmatprep.subr.mxu0 0.0
      %1514 = vmatpush1.msra.mxu0 0.0
      %1515 = vmatprep.subr.mxu0 0.0
      %1516 = vmatpush1.msra.mxu0 0.0
      %1517 = vmatprep.subr.mxu0 0.0
      %1518 = vmatpush1.msra.mxu0 0.0
      %1519 = vmatprep.subr.mxu0 0.0
      %1520 = vmatpush1.msra.mxu0 0.0
      %1521 = vmatprep.subr.mxu0 0.0
      %1522 = vmatpush1.msra.mxu0 0.0
      %1523 = vmatprep.subr.mxu0 0.0
      %1524 = vmatpush1.msra.mxu0 0.0
      %1525 = vmatprep.subr.mxu0 0.0
      %1526 = vmatpush1.msra.mxu0 %v1488
      %1527 = vmatprep.subr.mxu0 0.0
      %1528 = vmatpush1.msra.mxu0 %v1486
      %1529 = vmatprep.subr.mxu0 0.0
      %1530 = vmatpush2.msra.mxu0 0.0
      %1531 = vmatprep.subr.mxu0 0.0
      %1532 = vmatpush2.msra.mxu0 0.0
      %1533 = vmatprep.subr.mxu0 0.0
      %1534 = vmatpush2.msra.mxu0 0.0
      %1535 = vmatprep.subr.mxu0 0.0
      %1536 = vmatpush2.msra.mxu0 0.0
      %1537 = vmatprep.subr.mxu0 0.0
      %1538 = vmatpush2.msra.mxu0 0.0
      %1539 = vmatprep.subr.mxu0 0.0
      %1540 = vmatpush2.msra.mxu0 0.0
      %1541 = vmatprep.subr.mxu0 0.0
      %1542 = vmatpush2.msra.mxu0 0.0
      %1543 = vmatprep.subr.mxu0 0.0
      %1544 = vmatpush2.msra.mxu0 0.0
      %1545 = vmatprep.subr.mxu0 0.0
      %1546 = vmatpush2.msra.mxu0 0.0
      %1547 = vmatprep.subr.mxu0 0.0
      %1548 = vmatpush2.msra.mxu0 0.0
      %1549 = vmatprep.subr.mxu0 0.0
      %1550 = vmatpush2.msra.mxu0 0.0
      %1551 = vmatprep.subr.mxu0 0.0
      %1552 = vmatpush2.msra.mxu0 0.0
      %1553 = vmatprep.subr.mxu0 0.0
      %1554 = vmatpush2.msra.mxu0 0.0
      %1555 = vmatprep.subr.mxu0 0.0
      %1556 = vmatpush2.msra.mxu0 0.0
      %1557 = vmatprep.subr.mxu0 0.0
      %1558 = vmatpush2.msra.mxu0 0.0
      %1559 = vmatprep.subr.mxu0 0.0
      %1560 = vmatpush2.msra.mxu0 0.0
      %1561 = vmatprep.mubr.f32.mxu0 0.0
      %1562 = vmatmul.mubr.f32.gmra.mxu0 %v1492
      %v1563 = vpop.f32.mrf.mxu0
      %v1564 = vadd.f32 0.0, %v1563
      %v1565 = vpop.f32.mrf.mxu0
      %1566 = vmatprep.mubr.f32.mxu0 0.0
      %1567 = vmatmul.mubr.f32.gmra.mxu0 %v1495
      %v1568 = vpop.f32.mrf.mxu0
      %v1569 = vadd.f32 0.0, %v1568
      %v1570 = vpop.f32.mrf.mxu0
      %1571 = vdwg.mxu0
      %1574 = vrot.lane.b32.xlu0 %v1160, 8
      %v1575 = vpop.permute.xlu0 %1574
      %1576 = vrot.lane.b32.xlu0 %v1165, 8
      %v1577 = vpop.permute.xlu0 %1576
      %1582 = vrot.lane.b32.xlu0 %v1362, 16
      %v1583 = vpop.permute.xlu0 %1582
      %1584 = vrot.lane.b32.xlu0 %v1367, 16
      %v1585 = vpop.permute.xlu0 %1584
      %1590 = vrot.lane.b32.xlu0 %v1564, 24
      %v1591 = vpop.permute.xlu0 %1590
      %1592 = vrot.lane.b32.xlu0 %v1569, 24
      %v1593 = vpop.permute.xlu0 %1592
      %v1596 = vsel %vm770, %v956, %v1575
      %v1597 = vsel %vm770, %v961, %v1577
      %v1598 = vsel %vm860, %v1596, %v1583
      %v1599 = vsel %vm860, %v1597, %v1585
      %vm1600 = vcmask 195584
      %v1601 = vsel %vm1600, %v1598, %v1591
      %v1602 = vsel %vm1600, %v1599, %v1593
      %v1603 = vld [vmem:[%s10] sm:$0xff]
      %v1604 = vld [vmem:[%s10 + $0x8] sm:$0xff]
      %v1605 = vld [vmem:[%s10 + $0x10] sm:$0xff]
      %v1606 = vld [vmem:[%s10 + $0x18] sm:$0xff]
      %v1607 = vld [vmem:[%s11] sm:$0x1]
      %v1609 = vlaneseq
      %v1610 = vshrl.u32 %v1609, 7
      %v1611 = vsub.s32 0, %v1610
      %v1612 = vrot.slane %v1607, %v1611
      %v1615 = vsel %vm485, %v1601, 0
      %v1618 = vsel %vm485, %v1602, 0
      %1620 = vmatprep.subr.mxu0 0.0
      %1621 = vmatpush1.msra.mxu0 0.0
      %1622 = vmatprep.subr.mxu0 0.0
      %1623 = vmatpush1.msra.mxu0 0.0
      %1624 = vmatprep.subr.mxu0 0.0
      %1625 = vmatpush1.msra.mxu0 0.0
      %1626 = vmatprep.subr.mxu0 0.0
      %1627 = vmatpush1.msra.mxu0 0.0
      %1628 = vmatprep.subr.mxu0 0.0
      %1629 = vmatpush1.msra.mxu0 0.0
      %1630 = vmatprep.subr.mxu0 0.0
      %1631 = vmatpush1.msra.mxu0 0.0
      %1632 = vmatprep.subr.mxu0 0.0
      %1633 = vmatpush1.msra.mxu0 0.0
      %1634 = vmatprep.subr.mxu0 0.0
      %1635 = vmatpush1.msra.mxu0 0.0
      %1636 = vmatprep.subr.mxu0 0.0
      %1637 = vmatpush1.msra.mxu0 0.0
      %1638 = vmatprep.subr.mxu0 0.0
      %1639 = vmatpush1.msra.mxu0 0.0
      %1640 = vmatprep.subr.mxu0 0.0
      %1641 = vmatpush1.msra.mxu0 0.0
      %1642 = vmatprep.subr.mxu0 0.0
      %1643 = vmatpush1.msra.mxu0 0.0
      %1644 = vmatprep.subr.mxu0 0.0
      %1645 = vmatpush1.msra.mxu0 %v1606
      %1646 = vmatprep.subr.mxu0 0.0
      %1647 = vmatpush1.msra.mxu0 %v1605
      %1648 = vmatprep.subr.mxu0 0.0
      %1649 = vmatpush1.msra.mxu0 %v1604
      %1650 = vmatprep.subr.mxu0 0.0
      %1651 = vmatpush1.msra.mxu0 %v1603
      %1652 = vmatprep.subr.mxu0 0.0
      %1653 = vmatpush2.msra.mxu0 0.0
      %1654 = vmatprep.subr.mxu0 0.0
      %1655 = vmatpush2.msra.mxu0 0.0
      %1656 = vmatprep.subr.mxu0 0.0
      %1657 = vmatpush2.msra.mxu0 0.0
      %1658 = vmatprep.subr.mxu0 0.0
      %1659 = vmatpush2.msra.mxu0 0.0
      %1660 = vmatprep.subr.mxu0 0.0
      %1661 = vmatpush2.msra.mxu0 0.0
      %1662 = vmatprep.subr.mxu0 0.0
      %1663 = vmatpush2.msra.mxu0 0.0
      %1664 = vmatprep.subr.mxu0 0.0
      %1665 = vmatpush2.msra.mxu0 0.0
      %1666 = vmatprep.subr.mxu0 0.0
      %1667 = vmatpush2.msra.mxu0 0.0
      %1668 = vmatprep.subr.mxu0 0.0
      %1669 = vmatpush2.msra.mxu0 0.0
      %1670 = vmatprep.subr.mxu0 0.0
      %1671 = vmatpush2.msra.mxu0 0.0
      %1672 = vmatprep.subr.mxu0 0.0
      %1673 = vmatpush2.msra.mxu0 0.0
      %1674 = vmatprep.subr.mxu0 0.0
      %1675 = vmatpush2.msra.mxu0 0.0
      %1676 = vmatprep.subr.mxu0 0.0
      %1677 = vmatpush2.msra.mxu0 0.0
      %1678 = vmatprep.subr.mxu0 0.0
      %1679 = vmatpush2.msra.mxu0 0.0
      %1680 = vmatprep.subr.mxu0 0.0
      %1681 = vmatpush2.msra.mxu0 0.0
      %1682 = vmatprep.subr.mxu0 0.0
      %1683 = vmatpush2.msra.mxu0 0.0
      %1684 = vmatprep.mubr.f32.mxu0 0.0
      %1685 = vmatmul.mubr.f32.gmra.mxu0 %v1615
      %v1686 = vpop.f32.mrf.mxu0
      %v1687 = vadd.f32 %v1612, %v1686
      %v1688 = vpop.f32.mrf.mxu0
      %1689 = vmatprep.mubr.f32.mxu0 0.0
      %1690 = vmatmul.mubr.f32.gmra.mxu0 %v1618
      %v1691 = vpop.f32.mrf.mxu0
      %v1692 = vadd.f32 %v1612, %v1691
      %v1693 = vpop.f32.mrf.mxu0
      %1694 = vdwg.mxu0
      %1695 = vst.msk [vmem:[%s467] sm:$0xff] %vm485, %v1687
      %1696 = vst.msk [vmem:[%s467 + $0x8] sm:$0xff] %vm485, %v1692
      %p1697 = scmp.lt.s32.totalorder %s23, 1
      %s1698 = scalar_select %p1697, %s23, 1
      %s1699 = smul.addr %s1698, 2
      %s1700 = smul.addr %s1699, 8
      %s1701 = scalar_lea.vmem %s12, %s1700
      // Predicated region
      $region69: #{multi_head_attention_pallas.1} parent=67 // pred_check
        %p1702 = pneg %p313
      $region70: #{multi_head_attention_pallas.1} parent=67 // pred_check_branch
        %1704 = sbr.rel (%p1702) target = $region72
      $region71: #{multi_head_attention_pallas.1} parent=67 // pred_region
        _
      $region72: #{multi_head_attention_pallas.1} parent=67 // pred_fallthru
        _
    $region68: #{multi_head_attention_pallas.1} parent=5 // pred_fallthru
      _
    %p1705 = scmp.le.s32.totalorder 2, %s18
    // Predicated region
    $region73: #{multi_head_attention_pallas.1} parent=5 // pred_check
      %p1706 = pneg %p1705
    $region74: #{multi_head_attention_pallas.1} parent=5 // pred_check_branch
      %1708 = sbr.rel (%p1706) target = $region76
    $region75: #{multi_head_attention_pallas.1} parent=5 // pred_region
      %s1709 = ssub.s32 %s18, 2
      // Predicated region
      $region77: #{multi_head_attention_pallas.1} parent=75 // pred_check
        %p1710 = pneg %p319
      $region78: #{multi_head_attention_pallas.1} parent=75 // pred_check_branch
        %1712 = sbr.rel (%p1710) target = $region80
      $region79: #{multi_head_attention_pallas.1} parent=75 // pred_region
        %p1713 = scmp.lt.s32.totalorder %s24, 1
        %s1714 = scalar_select %p1713, %s24, 1
        %s1715 = smul.addr %s1714, 2
        %s1716 = smul.addr %s1715, 8
        %s1717 = scalar_lea.vmem %s12, %s1716
      $region80: #{multi_head_attention_pallas.1} parent=75 // pred_fallthru
        _
    $region76: #{multi_head_attention_pallas.1} parent=5 // pred_fallthru
      _
  $region6: #{multi_head_attention_pallas.1} parent=0 // loop_footer
    %s22 = sadd.s32 1, %s18
  $region7: #{multi_head_attention_pallas.1} parent=0 // loop_footer_branch
    %17 = sbr.rel target = $region3
  $region8: #{multi_head_attention_pallas.1} parent=0 // loop_exit
    _

</llo_original>
